<compile_context>
chip_gen: v7x
topology: tpu7x:2x2x1
jax: 0.10.0
libtpu: 0.0.40
codegen_flags: <defaults>
</compile_context>

<pallas_src>
import jax
import jax.numpy as jnp
from jax.experimental import pallas as pl
from jax.experimental.pallas import tpu as pltpu

VMEM = pl.BlockSpec(memory_space=pltpu.MemorySpace.VMEM)
SMEM = pl.BlockSpec(memory_space=pltpu.MemorySpace.SMEM)


# ------------------------------ Pallas kernel ---------------------------------
def _dgcnn_fused_kernel(bt_ref, dinv_ref, xt_ref, gw1_ref, gsc_ref, csc_ref,
                        fw1_ref, fb1_ref, fw2_ref, fb2_ref, fw3_ref, fb3_ref,
                        out_ref):
    """Whole DGCNN forward for one graph, fused.

    bt_ref  : [3, N, N]  VMEM  unnormalized (A_c + I)^T per edge channel
    dinv_ref: [3, 1, N]  VMEM  per-channel D^-1/2 row
    xt_ref  : [F, N]     VMEM  node features, feature-major
    gw1_ref : [1, F]     VMEM  gcnconv1 weight (row)
    gsc_ref : [5]        SMEM  (b1, w2, b2, w3, b3) scalar GCN params
    csc_ref : [14]       SMEM  (conv1d1 w[3,3] flat, conv1d1 b, conv1d2 w[3], conv1d2 b)
    fw1_ref : [3, L4, 32] VMEM fc1 weight (transposed, split per edge channel)
    fb1/fw2/fb2/fw3/fb3 : [1,32]/[32,6]/[1,6]/[6,2]/[1,2] VMEM
    out_ref : [1, 2]
    """
    n = bt_ref.shape[1]
    l1, l2, l3, l4 = n - 2, n - 4, n - 6, n - 8

    # ---- scalar params: each SMEM element is read exactly once (hoisted) ----
    b1 = gsc_ref[0]
    w2 = gsc_ref[1]
    b2 = gsc_ref[2]
    w3 = gsc_ref[3]
    b3 = gsc_ref[4]
    cw1 = [csc_ref[i] for i in range(9)]                # Conv1d(3->1,3) weights
    cb1 = csc_ref[9]
    cw2 = [csc_ref[10], csc_ref[11], csc_ref[12]]       # Conv1d(1->1,3) weights
    cb2 = csc_ref[13]

    # Shared first projection X @ W1, kept row-oriented: [1, N] (lane-dense).
    xw = jnp.dot(gw1_ref[...], xt_ref[...], preferred_element_type=jnp.float32)

    # ---- GCN hops, folded normalization, interleaved across the 3 channels ----
    # Normalized hop in row form: h' = ((h * dinv) @ (A+I)^T) * dinv.
    ats = [bt_ref[0], bt_ref[1], bt_ref[2]]             # [N, N] each
    dvs = [dinv_ref[0], dinv_ref[1], dinv_ref[2]]       # [1, N] each

    h1s = [jnp.dot(xw * dvs[c], ats[c],
                   preferred_element_type=jnp.float32) * dvs[c] + b1
           for c in range(3)]
    h2s = [w2 * (jnp.dot(h1s[c] * dvs[c], ats[c],
                         preferred_element_type=jnp.float32) * dvs[c]) + b2
           for c in range(3)]
    h3s = [w3 * (jnp.dot(h2s[c] * dvs[c], ats[c],
                         preferred_element_type=jnp.float32) * dvs[c]) + b3
           for c in range(3)]

    h = fb1_ref[...]                                    # fc1 accumulator [1, 32]

    for c in range(3):                                  # static unroll, 3 channels
        # ---------------- SortPool(k=N), O(N^2) VPU/XLU work ----------------
        # Stable descending sort by the last feature (h3), realized as a rank
        # computation + {0,1} permutation matmul.  No O(N^3) broadcasts.
        key = h3s[c]                                              # [1, N]
        row_i = jax.lax.broadcasted_iota(jnp.int32, (n, n), 0)    # cheap, per-use
        col_i = jax.lax.broadcasted_iota(jnp.int32, (n, n), 1)
        kj = jnp.broadcast_to(key, (n, n))                        # kj[i,j] = key[j]
        # key as a column (key[i] per sublane) via diag-mask + lane reduction.
        key_col = jnp.sum(jnp.where(row_i == col_i, kj, 0.0),
                          axis=-1, keepdims=True)                 # [N, 1]
        # cmp[i,j] = 1 iff node j precedes node i (descending, stable by index).
        cmp = (kj > key_col) | ((kj == key_col) & (col_i < row_i))
        rank_col = jnp.sum(cmp.astype(jnp.float32),
                           axis=-1, keepdims=True)                # [N, 1]
        perm_t = (rank_col == col_i.astype(jnp.float32)).astype(jnp.float32)

        # Stack (h1, h2, h3) as rows of a [3, N] matrix (cheap broadcast-select)
        # and apply the permutation with a single M=3 matmul.
        r3 = jax.lax.broadcasted_iota(jnp.int32, (3, n), 0)
        stacked = jnp.where(r3 == 0, jnp.broadcast_to(h1s[c], (3, n)),
                  jnp.where(r3 == 1, jnp.broadcast_to(h2s[c], (3, n)),
                                     jnp.broadcast_to(h3s[c], (3, n))))
        srt = jnp.dot(stacked, perm_t,
                      preferred_element_type=jnp.float32)         # [3, N] sorted

        # Conv1d(3->1,k=3,s=1) -> MaxPool1d(3,s=1) -> Conv1d(1->1,k=3,s=1)
        # -> MaxPool1d(3,s=1); window slices slide along the lane axis.
        acc = jnp.zeros((1, l1), jnp.float32) + cb1
        for ic in range(3):
            for k in range(3):
                acc = acc + cw1[ic * 3 + k] * srt[ic:ic + 1, k:k + l1]
        m1 = jnp.maximum(jnp.maximum(acc[:, 0:l2], acc[:, 1:1 + l2]),
                         acc[:, 2:2 + l2])
        acc2 = (cw2[0] * m1[:, 0:l3] + cw2[1] * m1[:, 1:1 + l3]
                + cw2[2] * m1[:, 2:2 + l3] + cb2)
        pooled = jnp.maximum(jnp.maximum(acc2[:, 0:l4], acc2[:, 1:1 + l4]),
                             acc2[:, 2:2 + l4])                   # [1, L4]

        # fc1 contribution of this channel (flat layout is [x1 | x2 | x3]).
        h = h + jnp.dot(pooled, fw1_ref[c], preferred_element_type=jnp.float32)

    def elu(v):
        # exp only on the clamped negative branch -> no overflow on the
        # unselected branch.
        return jnp.where(v > 0, v, jnp.exp(jnp.minimum(v, 0.0)) - 1.0)

    h = elu(h)                                          # dropout p=0 -> identity
    h = elu(jnp.dot(h, fw2_ref[...], preferred_element_type=jnp.float32)
            + fb2_ref[...])
    out_ref[...] = (jnp.dot(h, fw3_ref[...], preferred_element_type=jnp.float32)
                    + fb3_ref[...])


# -------------------------------- JAX glue -------------------------------------
def build_graph_tensors(edge_index, edge_attr, num_nodes):
    """Unnormalized transposed adjacency + D^-1/2 row per edge channel.

    Returns (bt, dinv) with bt[c] = (A_c + I)^T (bt[c, src, dst] += w) and
    dinv[c, 0, j] = deg_c(j)^-1/2 where deg_c(j) = sum_i (A_c + I)[j, i]
    (destination-aggregated degree, PyG gcn_norm convention).  The symmetric
    D^-1/2 (.) D^-1/2 scaling is folded into the kernel (two [1,N] VPU
    multiplies per hop), so the [3,N,N] tensor is written/read by HBM once.
    """
    src, dst = edge_index[0], edge_index[1]
    c = edge_attr.shape[1]
    w = edge_attr.astype(jnp.float32).T                  # [C, E]
    bt = jnp.zeros((c, num_nodes, num_nodes), jnp.float32)
    bt = bt.at[:, src, dst].add(w)                       # A_c[dst,src]=w -> bt=A_c^T
    bt = bt + jnp.eye(num_nodes, dtype=jnp.float32)[None]  # self loops, weight 1
    deg = jnp.sum(bt, axis=1)                            # [C, N]
    dinv = jnp.where(deg > 0, jax.lax.rsqrt(deg), 0.0)
    return bt, dinv.reshape(c, 1, num_nodes)


def dgcnn_forward(params, x, edge_index, edge_attr):
    n = x.shape[0]
    l4 = n - 8
    g = params["gcsp1"]
    m = params["mlp"]

    bt, dinv = build_graph_tensors(edge_index, edge_attr, n)  # [3,N,N], [3,1,N]
    xt = x.astype(jnp.float32).T                              # [F, N]
    gw1 = g["w1"].T                                           # [1, F]
    gsc = jnp.concatenate([g["b1"].reshape(-1), g["w2"].reshape(-1),
                           g["b2"].reshape(-1), g["w3"].reshape(-1),
                           g["b3"].reshape(-1)])               # [5]  SMEM scalars
    csc = jnp.concatenate([g["cw1"].reshape(-1), g["cb1"].reshape(-1),
                           g["cw2"].reshape(-1), g["cb2"].reshape(-1)])  # [14]
    fw1 = m["w1"].reshape(3, l4, 32)

    # Original code uses dgcnnconv_channel1 (shared params) for all 3 channels.
    logits = pl.pallas_call(
        _dgcnn_fused_kernel,
        out_shape=jax.ShapeDtypeStruct((1, 2), jnp.float32),
        in_specs=[VMEM, VMEM, VMEM, VMEM, SMEM, SMEM,
                  VMEM, VMEM, VMEM, VMEM, VMEM, VMEM],
        out_specs=VMEM,
    )(bt, dinv, xt, gw1, gsc, csc, fw1,
      m["b1"], m["w2"], m["b2"], m["w3"], m["b3"])

    reg = jnp.zeros((1,), jnp.float32)
    return logits, reg


def init_params(key, num_features, flat_dim):
    keys = jax.random.split(key, 16)

    def nrm(k, shape, scale=0.2):
        return (scale * jax.random.normal(k, shape)).astype(jnp.float32)

    gcsp = dict(
        w1=nrm(keys[0], (num_features, 1)), b1=nrm(keys[1], (1,)),
        w2=nrm(keys[2], (1,)), b2=nrm(keys[3], (1,)),
        w3=nrm(keys[4], (1,)), b3=nrm(keys[5], (1,)),
        cw1=nrm(keys[6], (3, 3)), cb1=nrm(keys[7], (1,)),     # Conv1d(3,1,3)
        cw2=nrm(keys[8], (3,)), cb2=nrm(keys[9], (1,)),       # Conv1d(1,1,3)
    )
    mlp = dict(
        w1=nrm(keys[10], (flat_dim, 32)), b1=nrm(keys[11], (1, 32)),
        w2=nrm(keys[12], (32, 6)), b2=nrm(keys[13], (1, 6)),
        w3=nrm(keys[14], (6, 2)), b3=nrm(keys[15], (1, 2)),
    )
    return dict(gcsp1=gcsp, mlp=mlp)


if __name__ == "__main__":
    N = 16           # num_nodes (source hard-codes 129 via fc1; scaled down here)
    F = 4            # num_node_features
    E = 40           # num_edges
    C = 3            # edge-attr channels

    key = jax.random.PRNGKey(0)
    k1, k2, k3, k4, k5 = jax.random.split(key, 5)
    src = jax.random.randint(k1, (E,), 0, N)
    off = jax.random.randint(k2, (E,), 1, N)            # avoid self loops
    dst = (src + off) % N
    edge_index = jnp.stack([src, dst]).astype(jnp.int32)            # [2, E]
    edge_attr = jax.random.uniform(k3, (E, C), minval=0.5,
                                   maxval=1.5).astype(jnp.float32)  # [E, 3]
    x = jax.random.normal(k4, (N, F)).astype(jnp.float32)           # [N, F]

    params = init_params(k5, F, C * (N - 8))

    fwd = jax.jit(dgcnn_forward)
    logits, reg = fwd(params, x, edge_index, edge_attr)
    jax.block_until_ready((logits, reg))
    assert logits.shape == (1, 2) and reg.shape == (1,)
    print("KERNEL_OK")
</pallas_src>

<mosaic_0001>
module attributes {stable_mosaic.version = 11 : i64} {
  func.func @_dgcnn_fused_kernel(%arg0: memref<3x16x16xf32, #tpu.memory_space<vmem>>, %arg1: memref<3x1x16xf32, #tpu.memory_space<vmem>>, %arg2: memref<4x16xf32, #tpu.memory_space<vmem>>, %arg3: memref<1x4xf32, #tpu.memory_space<vmem>>, %arg4: memref<5xf32, #tpu.memory_space<smem>>, %arg5: memref<14xf32, #tpu.memory_space<smem>>, %arg6: memref<3x8x32xf32, #tpu.memory_space<vmem>>, %arg7: memref<1x32xf32, #tpu.memory_space<vmem>>, %arg8: memref<32x6xf32, #tpu.memory_space<vmem>>, %arg9: memref<1x6xf32, #tpu.memory_space<vmem>>, %arg10: memref<6x2xf32, #tpu.memory_space<vmem>>, %arg11: memref<1x2xf32, #tpu.memory_space<vmem>>, %arg12: memref<1x2xf32, #tpu.memory_space<vmem>>) attributes {dimension_semantics = [], scalar_prefetch = 0 : i64, scratch_operands = 0 : i64, tpu.core_type = #tpu.core_type<tc>} {
    %c0 = arith.constant 0 : index
    %0 = memref.load %arg4[%c0] : memref<5xf32, #tpu.memory_space<smem>>
    %c1 = arith.constant 1 : index
    %1 = memref.load %arg4[%c1] : memref<5xf32, #tpu.memory_space<smem>>
    %c2 = arith.constant 2 : index
    %2 = memref.load %arg4[%c2] : memref<5xf32, #tpu.memory_space<smem>>
    %c3 = arith.constant 3 : index
    %3 = memref.load %arg4[%c3] : memref<5xf32, #tpu.memory_space<smem>>
    %c4 = arith.constant 4 : index
    %4 = memref.load %arg4[%c4] : memref<5xf32, #tpu.memory_space<smem>>
    %c0_0 = arith.constant 0 : index
    %5 = memref.load %arg5[%c0_0] : memref<14xf32, #tpu.memory_space<smem>>
    %c1_1 = arith.constant 1 : index
    %6 = memref.load %arg5[%c1_1] : memref<14xf32, #tpu.memory_space<smem>>
    %c2_2 = arith.constant 2 : index
    %7 = memref.load %arg5[%c2_2] : memref<14xf32, #tpu.memory_space<smem>>
    %c3_3 = arith.constant 3 : index
    %8 = memref.load %arg5[%c3_3] : memref<14xf32, #tpu.memory_space<smem>>
    %c4_4 = arith.constant 4 : index
    %9 = memref.load %arg5[%c4_4] : memref<14xf32, #tpu.memory_space<smem>>
    %c5 = arith.constant 5 : index
    %10 = memref.load %arg5[%c5] : memref<14xf32, #tpu.memory_space<smem>>
    %c6 = arith.constant 6 : index
    %11 = memref.load %arg5[%c6] : memref<14xf32, #tpu.memory_space<smem>>
    %c7 = arith.constant 7 : index
    %12 = memref.load %arg5[%c7] : memref<14xf32, #tpu.memory_space<smem>>
    %c8 = arith.constant 8 : index
    %13 = memref.load %arg5[%c8] : memref<14xf32, #tpu.memory_space<smem>>
    %c9 = arith.constant 9 : index
    %14 = memref.load %arg5[%c9] : memref<14xf32, #tpu.memory_space<smem>>
    %c10 = arith.constant 10 : index
    %15 = memref.load %arg5[%c10] : memref<14xf32, #tpu.memory_space<smem>>
    %c11 = arith.constant 11 : index
    %16 = memref.load %arg5[%c11] : memref<14xf32, #tpu.memory_space<smem>>
    %c12 = arith.constant 12 : index
    %17 = memref.load %arg5[%c12] : memref<14xf32, #tpu.memory_space<smem>>
    %c13 = arith.constant 13 : index
    %18 = memref.load %arg5[%c13] : memref<14xf32, #tpu.memory_space<smem>>
    %c0_5 = arith.constant 0 : index
    %c0_6 = arith.constant 0 : index
    %19 = vector.load %arg3[%c0_5, %c0_6] : memref<1x4xf32, #tpu.memory_space<vmem>>, vector<1x4xf32>
    %c0_7 = arith.constant 0 : index
    %c0_8 = arith.constant 0 : index
    %20 = vector.load %arg2[%c0_7, %c0_8] : memref<4x16xf32, #tpu.memory_space<vmem>>, vector<4x16xf32>
    %cst = arith.constant dense<0.000000e+00> : vector<1x16xf32>
    %21 = tpu.matmul %19, %20, %cst {dimension_numbers = #tpu.dot_dimension_numbers<[1], [0], [0], [1], [0, 0, 1, 1], [], []>} : vector<1x4xf32>, vector<4x16xf32>, vector<1x16xf32> -> vector<1x16xf32>
    %c0_9 = arith.constant 0 : index
    %c0_10 = arith.constant 0 : index
    %c0_11 = arith.constant 0 : index
    %22 = vector.load %arg0[%c0_9, %c0_10, %c0_11] : memref<3x16x16xf32, #tpu.memory_space<vmem>>, vector<1x16x16xf32>
    %23 = vector.shape_cast %22 : vector<1x16x16xf32> to vector<16x16xf32>
    %c1_12 = arith.constant 1 : index
    %c0_13 = arith.constant 0 : index
    %c0_14 = arith.constant 0 : index
    %24 = vector.load %arg0[%c1_12, %c0_13, %c0_14] : memref<3x16x16xf32, #tpu.memory_space<vmem>>, vector<1x16x16xf32>
    %25 = vector.shape_cast %24 : vector<1x16x16xf32> to vector<16x16xf32>
    %c2_15 = arith.constant 2 : index
    %c0_16 = arith.constant 0 : index
    %c0_17 = arith.constant 0 : index
    %26 = vector.load %arg0[%c2_15, %c0_16, %c0_17] : memref<3x16x16xf32, #tpu.memory_space<vmem>>, vector<1x16x16xf32>
    %27 = vector.shape_cast %26 : vector<1x16x16xf32> to vector<16x16xf32>
    %c0_18 = arith.constant 0 : index
    %c0_19 = arith.constant 0 : index
    %c0_20 = arith.constant 0 : index
    %28 = vector.load %arg1[%c0_18, %c0_19, %c0_20] : memref<3x1x16xf32, #tpu.memory_space<vmem>>, vector<1x1x16xf32>
    %29 = vector.shape_cast %28 : vector<1x1x16xf32> to vector<1x16xf32>
    %c1_21 = arith.constant 1 : index
    %c0_22 = arith.constant 0 : index
    %c0_23 = arith.constant 0 : index
    %30 = vector.load %arg1[%c1_21, %c0_22, %c0_23] : memref<3x1x16xf32, #tpu.memory_space<vmem>>, vector<1x1x16xf32>
    %31 = vector.shape_cast %30 : vector<1x1x16xf32> to vector<1x16xf32>
    %c2_24 = arith.constant 2 : index
    %c0_25 = arith.constant 0 : index
    %c0_26 = arith.constant 0 : index
    %32 = vector.load %arg1[%c2_24, %c0_25, %c0_26] : memref<3x1x16xf32, #tpu.memory_space<vmem>>, vector<1x1x16xf32>
    %33 = vector.shape_cast %32 : vector<1x1x16xf32> to vector<1x16xf32>
    %34 = arith.mulf %21, %29 : vector<1x16xf32>
    %cst_27 = arith.constant dense<0.000000e+00> : vector<1x16xf32>
    %35 = tpu.matmul %34, %23, %cst_27 {dimension_numbers = #tpu.dot_dimension_numbers<[1], [0], [0], [1], [0, 0, 1, 1], [], []>} : vector<1x16xf32>, vector<16x16xf32>, vector<1x16xf32> -> vector<1x16xf32>
    %36 = arith.mulf %35, %29 : vector<1x16xf32>
    %37 = vector.broadcast %0 : f32 to vector<1x16xf32>
    %38 = arith.addf %36, %37 : vector<1x16xf32>
    %39 = arith.mulf %21, %31 : vector<1x16xf32>
    %cst_28 = arith.constant dense<0.000000e+00> : vector<1x16xf32>
    %40 = tpu.matmul %39, %25, %cst_28 {dimension_numbers = #tpu.dot_dimension_numbers<[1], [0], [0], [1], [0, 0, 1, 1], [], []>} : vector<1x16xf32>, vector<16x16xf32>, vector<1x16xf32> -> vector<1x16xf32>
    %41 = arith.mulf %40, %31 : vector<1x16xf32>
    %42 = vector.broadcast %0 : f32 to vector<1x16xf32>
    %43 = arith.addf %41, %42 : vector<1x16xf32>
    %44 = arith.mulf %21, %33 : vector<1x16xf32>
    %cst_29 = arith.constant dense<0.000000e+00> : vector<1x16xf32>
    %45 = tpu.matmul %44, %27, %cst_29 {dimension_numbers = #tpu.dot_dimension_numbers<[1], [0], [0], [1], [0, 0, 1, 1], [], []>} : vector<1x16xf32>, vector<16x16xf32>, vector<1x16xf32> -> vector<1x16xf32>
    %46 = arith.mulf %45, %33 : vector<1x16xf32>
    %47 = vector.broadcast %0 : f32 to vector<1x16xf32>
    %48 = arith.addf %46, %47 : vector<1x16xf32>
    %49 = arith.mulf %38, %29 : vector<1x16xf32>
    %cst_30 = arith.constant dense<0.000000e+00> : vector<1x16xf32>
    %50 = tpu.matmul %49, %23, %cst_30 {dimension_numbers = #tpu.dot_dimension_numbers<[1], [0], [0], [1], [0, 0, 1, 1], [], []>} : vector<1x16xf32>, vector<16x16xf32>, vector<1x16xf32> -> vector<1x16xf32>
    %51 = arith.mulf %50, %29 : vector<1x16xf32>
    %52 = vector.broadcast %1 : f32 to vector<1x16xf32>
    %53 = arith.mulf %52, %51 : vector<1x16xf32>
    %54 = vector.broadcast %2 : f32 to vector<1x16xf32>
    %55 = arith.addf %53, %54 : vector<1x16xf32>
    %56 = arith.mulf %43, %31 : vector<1x16xf32>
    %cst_31 = arith.constant dense<0.000000e+00> : vector<1x16xf32>
    %57 = tpu.matmul %56, %25, %cst_31 {dimension_numbers = #tpu.dot_dimension_numbers<[1], [0], [0], [1], [0, 0, 1, 1], [], []>} : vector<1x16xf32>, vector<16x16xf32>, vector<1x16xf32> -> vector<1x16xf32>
    %58 = arith.mulf %57, %31 : vector<1x16xf32>
    %59 = vector.broadcast %1 : f32 to vector<1x16xf32>
    %60 = arith.mulf %59, %58 : vector<1x16xf32>
    %61 = vector.broadcast %2 : f32 to vector<1x16xf32>
    %62 = arith.addf %60, %61 : vector<1x16xf32>
    %63 = arith.mulf %48, %33 : vector<1x16xf32>
    %cst_32 = arith.constant dense<0.000000e+00> : vector<1x16xf32>
    %64 = tpu.matmul %63, %27, %cst_32 {dimension_numbers = #tpu.dot_dimension_numbers<[1], [0], [0], [1], [0, 0, 1, 1], [], []>} : vector<1x16xf32>, vector<16x16xf32>, vector<1x16xf32> -> vector<1x16xf32>
    %65 = arith.mulf %64, %33 : vector<1x16xf32>
    %66 = vector.broadcast %1 : f32 to vector<1x16xf32>
    %67 = arith.mulf %66, %65 : vector<1x16xf32>
    %68 = vector.broadcast %2 : f32 to vector<1x16xf32>
    %69 = arith.addf %67, %68 : vector<1x16xf32>
    %70 = arith.mulf %55, %29 : vector<1x16xf32>
    %cst_33 = arith.constant dense<0.000000e+00> : vector<1x16xf32>
    %71 = tpu.matmul %70, %23, %cst_33 {dimension_numbers = #tpu.dot_dimension_numbers<[1], [0], [0], [1], [0, 0, 1, 1], [], []>} : vector<1x16xf32>, vector<16x16xf32>, vector<1x16xf32> -> vector<1x16xf32>
    %72 = arith.mulf %71, %29 : vector<1x16xf32>
    %73 = vector.broadcast %3 : f32 to vector<1x16xf32>
    %74 = arith.mulf %73, %72 : vector<1x16xf32>
    %75 = vector.broadcast %4 : f32 to vector<1x16xf32>
    %76 = arith.addf %74, %75 : vector<1x16xf32>
    %77 = arith.mulf %62, %31 : vector<1x16xf32>
    %cst_34 = arith.constant dense<0.000000e+00> : vector<1x16xf32>
    %78 = tpu.matmul %77, %25, %cst_34 {dimension_numbers = #tpu.dot_dimension_numbers<[1], [0], [0], [1], [0, 0, 1, 1], [], []>} : vector<1x16xf32>, vector<16x16xf32>, vector<1x16xf32> -> vector<1x16xf32>
    %79 = arith.mulf %78, %31 : vector<1x16xf32>
    %80 = vector.broadcast %3 : f32 to vector<1x16xf32>
    %81 = arith.mulf %80, %79 : vector<1x16xf32>
    %82 = vector.broadcast %4 : f32 to vector<1x16xf32>
    %83 = arith.addf %81, %82 : vector<1x16xf32>
    %84 = arith.mulf %69, %33 : vector<1x16xf32>
    %cst_35 = arith.constant dense<0.000000e+00> : vector<1x16xf32>
    %85 = tpu.matmul %84, %27, %cst_35 {dimension_numbers = #tpu.dot_dimension_numbers<[1], [0], [0], [1], [0, 0, 1, 1], [], []>} : vector<1x16xf32>, vector<16x16xf32>, vector<1x16xf32> -> vector<1x16xf32>
    %86 = arith.mulf %85, %33 : vector<1x16xf32>
    %87 = vector.broadcast %3 : f32 to vector<1x16xf32>
    %88 = arith.mulf %87, %86 : vector<1x16xf32>
    %89 = vector.broadcast %4 : f32 to vector<1x16xf32>
    %90 = arith.addf %88, %89 : vector<1x16xf32>
    %c0_36 = arith.constant 0 : index
    %c0_37 = arith.constant 0 : index
    %91 = vector.load %arg7[%c0_36, %c0_37] : memref<1x32xf32, #tpu.memory_space<vmem>>, vector<1x32xf32>
    %92 = tpu.iota {dimensions = array<i32: 0>} : vector<16x16xi32>
    %93 = tpu.iota {dimensions = array<i32: 1>} : vector<16x16xi32>
    %94 = vector.shape_cast %76 : vector<1x16xf32> to vector<1x16xf32>
    %95 = vector.broadcast %94 : vector<1x16xf32> to vector<16x16xf32>
    %96 = arith.cmpi eq, %92, %93 : vector<16x16xi32>
    %cst_38 = arith.constant 0.000000e+00 : f32
    %97 = vector.broadcast %cst_38 : f32 to vector<16x16xf32>
    %98 = arith.select %96, %95, %97 : vector<16x16xi1>, vector<16x16xf32>
    %cst_39 = arith.constant dense<0.000000e+00> : vector<16xf32>
    %99 = vector.multi_reduction <add>, %98, %cst_39 [1] : vector<16x16xf32> to vector<16xf32>
    %100 = vector.shape_cast %99 : vector<16xf32> to vector<16x1xf32>
    %101 = vector.broadcast %100 : vector<16x1xf32> to vector<16x16xf32>
    %102 = arith.cmpf ogt, %95, %101 : vector<16x16xf32>
    %103 = vector.broadcast %100 : vector<16x1xf32> to vector<16x16xf32>
    %104 = arith.cmpf oeq, %95, %103 : vector<16x16xf32>
    %105 = arith.cmpi slt, %93, %92 : vector<16x16xi32>
    %106 = arith.andi %104, %105 : vector<16x16xi1>
    %107 = arith.ori %102, %106 : vector<16x16xi1>
    %108 = arith.extui %107 : vector<16x16xi1> to vector<16x16xi32>
    %109 = arith.sitofp %108 : vector<16x16xi32> to vector<16x16xf32>
    %cst_40 = arith.constant dense<0.000000e+00> : vector<16xf32>
    %110 = vector.multi_reduction <add>, %109, %cst_40 [1] : vector<16x16xf32> to vector<16xf32>
    %111 = vector.shape_cast %110 : vector<16xf32> to vector<16x1xf32>
    %112 = arith.sitofp %93 : vector<16x16xi32> to vector<16x16xf32>
    %113 = vector.broadcast %111 : vector<16x1xf32> to vector<16x16xf32>
    %114 = arith.cmpf oeq, %113, %112 : vector<16x16xf32>
    %115 = arith.extui %114 : vector<16x16xi1> to vector<16x16xi32>
    %116 = arith.sitofp %115 : vector<16x16xi32> to vector<16x16xf32>
    %117 = tpu.iota {dimensions = array<i32: 0>} : vector<3x16xi32>
    %c0_i32 = arith.constant 0 : i32
    %118 = vector.broadcast %c0_i32 : i32 to vector<3x16xi32>
    %119 = arith.cmpi eq, %117, %118 : vector<3x16xi32>
    %120 = vector.shape_cast %38 : vector<1x16xf32> to vector<1x16xf32>
    %121 = vector.broadcast %120 : vector<1x16xf32> to vector<3x16xf32>
    %c1_i32 = arith.constant 1 : i32
    %122 = vector.broadcast %c1_i32 : i32 to vector<3x16xi32>
    %123 = arith.cmpi eq, %117, %122 : vector<3x16xi32>
    %124 = vector.shape_cast %55 : vector<1x16xf32> to vector<1x16xf32>
    %125 = vector.broadcast %124 : vector<1x16xf32> to vector<3x16xf32>
    %126 = vector.shape_cast %76 : vector<1x16xf32> to vector<1x16xf32>
    %127 = vector.broadcast %126 : vector<1x16xf32> to vector<3x16xf32>
    %128 = arith.select %123, %125, %127 : vector<3x16xi1>, vector<3x16xf32>
    %129 = arith.select %119, %121, %128 : vector<3x16xi1>, vector<3x16xf32>
    %cst_41 = arith.constant dense<0.000000e+00> : vector<3x16xf32>
    %130 = tpu.matmul %129, %116, %cst_41 {dimension_numbers = #tpu.dot_dimension_numbers<[1], [0], [0], [1], [0, 0, 1, 1], [], []>} : vector<3x16xf32>, vector<16x16xf32>, vector<3x16xf32> -> vector<3x16xf32>
    %cst_42 = arith.constant 0.000000e+00 : f32
    %131 = vector.broadcast %cst_42 : f32 to vector<1x14xf32>
    %132 = vector.broadcast %14 : f32 to vector<1x14xf32>
    %133 = arith.addf %131, %132 : vector<1x14xf32>
    %134 = vector.extract_strided_slice %130 {offsets = [0, 0], sizes = [1, 14], strides = [1, 1]} : vector<3x16xf32> to vector<1x14xf32>
    %135 = vector.broadcast %5 : f32 to vector<1x14xf32>
    %136 = arith.mulf %135, %134 : vector<1x14xf32>
    %137 = arith.addf %133, %136 : vector<1x14xf32>
    %138 = vector.extract_strided_slice %130 {offsets = [0, 1], sizes = [1, 14], strides = [1, 1]} : vector<3x16xf32> to vector<1x14xf32>
    %139 = vector.broadcast %6 : f32 to vector<1x14xf32>
    %140 = arith.mulf %139, %138 : vector<1x14xf32>
    %141 = arith.addf %137, %140 : vector<1x14xf32>
    %142 = vector.extract_strided_slice %130 {offsets = [0, 2], sizes = [1, 14], strides = [1, 1]} : vector<3x16xf32> to vector<1x14xf32>
    %143 = vector.broadcast %7 : f32 to vector<1x14xf32>
    %144 = arith.mulf %143, %142 : vector<1x14xf32>
    %145 = arith.addf %141, %144 : vector<1x14xf32>
    %146 = vector.extract_strided_slice %130 {offsets = [1, 0], sizes = [1, 14], strides = [1, 1]} : vector<3x16xf32> to vector<1x14xf32>
    %147 = vector.broadcast %8 : f32 to vector<1x14xf32>
    %148 = arith.mulf %147, %146 : vector<1x14xf32>
    %149 = arith.addf %145, %148 : vector<1x14xf32>
    %150 = vector.extract_strided_slice %130 {offsets = [1, 1], sizes = [1, 14], strides = [1, 1]} : vector<3x16xf32> to vector<1x14xf32>
    %151 = vector.broadcast %9 : f32 to vector<1x14xf32>
    %152 = arith.mulf %151, %150 : vector<1x14xf32>
    %153 = arith.addf %149, %152 : vector<1x14xf32>
    %154 = vector.extract_strided_slice %130 {offsets = [1, 2], sizes = [1, 14], strides = [1, 1]} : vector<3x16xf32> to vector<1x14xf32>
    %155 = vector.broadcast %10 : f32 to vector<1x14xf32>
    %156 = arith.mulf %155, %154 : vector<1x14xf32>
    %157 = arith.addf %153, %156 : vector<1x14xf32>
    %158 = vector.extract_strided_slice %130 {offsets = [2, 0], sizes = [1, 14], strides = [1, 1]} : vector<3x16xf32> to vector<1x14xf32>
    %159 = vector.broadcast %11 : f32 to vector<1x14xf32>
    %160 = arith.mulf %159, %158 : vector<1x14xf32>
    %161 = arith.addf %157, %160 : vector<1x14xf32>
    %162 = vector.extract_strided_slice %130 {offsets = [2, 1], sizes = [1, 14], strides = [1, 1]} : vector<3x16xf32> to vector<1x14xf32>
    %163 = vector.broadcast %12 : f32 to vector<1x14xf32>
    %164 = arith.mulf %163, %162 : vector<1x14xf32>
    %165 = arith.addf %161, %164 : vector<1x14xf32>
    %166 = vector.extract_strided_slice %130 {offsets = [2, 2], sizes = [1, 14], strides = [1, 1]} : vector<3x16xf32> to vector<1x14xf32>
    %167 = vector.broadcast %13 : f32 to vector<1x14xf32>
    %168 = arith.mulf %167, %166 : vector<1x14xf32>
    %169 = arith.addf %165, %168 : vector<1x14xf32>
    %170 = vector.extract_strided_slice %169 {offsets = [0, 0], sizes = [1, 12], strides = [1, 1]} : vector<1x14xf32> to vector<1x12xf32>
    %171 = vector.extract_strided_slice %169 {offsets = [0, 1], sizes = [1, 12], strides = [1, 1]} : vector<1x14xf32> to vector<1x12xf32>
    %172 = arith.maximumf %170, %171 : vector<1x12xf32>
    %173 = vector.extract_strided_slice %169 {offsets = [0, 2], sizes = [1, 12], strides = [1, 1]} : vector<1x14xf32> to vector<1x12xf32>
    %174 = arith.maximumf %172, %173 : vector<1x12xf32>
    %175 = vector.extract_strided_slice %174 {offsets = [0, 0], sizes = [1, 10], strides = [1, 1]} : vector<1x12xf32> to vector<1x10xf32>
    %176 = vector.broadcast %15 : f32 to vector<1x10xf32>
    %177 = arith.mulf %176, %175 : vector<1x10xf32>
    %178 = vector.extract_strided_slice %174 {offsets = [0, 1], sizes = [1, 10], strides = [1, 1]} : vector<1x12xf32> to vector<1x10xf32>
    %179 = vector.broadcast %16 : f32 to vector<1x10xf32>
    %180 = arith.mulf %179, %178 : vector<1x10xf32>
    %181 = arith.addf %177, %180 : vector<1x10xf32>
    %182 = vector.extract_strided_slice %174 {offsets = [0, 2], sizes = [1, 10], strides = [1, 1]} : vector<1x12xf32> to vector<1x10xf32>
    %183 = vector.broadcast %17 : f32 to vector<1x10xf32>
    %184 = arith.mulf %183, %182 : vector<1x10xf32>
    %185 = arith.addf %181, %184 : vector<1x10xf32>
    %186 = vector.broadcast %18 : f32 to vector<1x10xf32>
    %187 = arith.addf %185, %186 : vector<1x10xf32>
    %188 = vector.extract_strided_slice %187 {offsets = [0, 0], sizes = [1, 8], strides = [1, 1]} : vector<1x10xf32> to vector<1x8xf32>
    %189 = vector.extract_strided_slice %187 {offsets = [0, 1], sizes = [1, 8], strides = [1, 1]} : vector<1x10xf32> to vector<1x8xf32>
    %190 = arith.maximumf %188, %189 : vector<1x8xf32>
    %191 = vector.extract_strided_slice %187 {offsets = [0, 2], sizes = [1, 8], strides = [1, 1]} : vector<1x10xf32> to vector<1x8xf32>
    %192 = arith.maximumf %190, %191 : vector<1x8xf32>
    %c0_43 = arith.constant 0 : index
    %c0_44 = arith.constant 0 : index
    %c0_45 = arith.constant 0 : index
    %193 = vector.load %arg6[%c0_43, %c0_44, %c0_45] : memref<3x8x32xf32, #tpu.memory_space<vmem>>, vector<1x8x32xf32>
    %194 = vector.shape_cast %193 : vector<1x8x32xf32> to vector<8x32xf32>
    %cst_46 = arith.constant dense<0.000000e+00> : vector<1x32xf32>
    %195 = tpu.matmul %192, %194, %cst_46 {dimension_numbers = #tpu.dot_dimension_numbers<[1], [0], [0], [1], [0, 0, 1, 1], [], []>} : vector<1x8xf32>, vector<8x32xf32>, vector<1x32xf32> -> vector<1x32xf32>
    %196 = arith.addf %91, %195 : vector<1x32xf32>
    %197 = tpu.iota {dimensions = array<i32: 0>} : vector<16x16xi32>
    %198 = tpu.iota {dimensions = array<i32: 1>} : vector<16x16xi32>
    %199 = vector.shape_cast %83 : vector<1x16xf32> to vector<1x16xf32>
    %200 = vector.broadcast %199 : vector<1x16xf32> to vector<16x16xf32>
    %201 = arith.cmpi eq, %197, %198 : vector<16x16xi32>
    %cst_47 = arith.constant 0.000000e+00 : f32
    %202 = vector.broadcast %cst_47 : f32 to vector<16x16xf32>
    %203 = arith.select %201, %200, %202 : vector<16x16xi1>, vector<16x16xf32>
    %cst_48 = arith.constant dense<0.000000e+00> : vector<16xf32>
    %204 = vector.multi_reduction <add>, %203, %cst_48 [1] : vector<16x16xf32> to vector<16xf32>
    %205 = vector.shape_cast %204 : vector<16xf32> to vector<16x1xf32>
    %206 = vector.broadcast %205 : vector<16x1xf32> to vector<16x16xf32>
    %207 = arith.cmpf ogt, %200, %206 : vector<16x16xf32>
    %208 = vector.broadcast %205 : vector<16x1xf32> to vector<16x16xf32>
    %209 = arith.cmpf oeq, %200, %208 : vector<16x16xf32>
    %210 = arith.cmpi slt, %198, %197 : vector<16x16xi32>
    %211 = arith.andi %209, %210 : vector<16x16xi1>
    %212 = arith.ori %207, %211 : vector<16x16xi1>
    %213 = arith.extui %212 : vector<16x16xi1> to vector<16x16xi32>
    %214 = arith.sitofp %213 : vector<16x16xi32> to vector<16x16xf32>
    %cst_49 = arith.constant dense<0.000000e+00> : vector<16xf32>
    %215 = vector.multi_reduction <add>, %214, %cst_49 [1] : vector<16x16xf32> to vector<16xf32>
    %216 = vector.shape_cast %215 : vector<16xf32> to vector<16x1xf32>
    %217 = arith.sitofp %198 : vector<16x16xi32> to vector<16x16xf32>
    %218 = vector.broadcast %216 : vector<16x1xf32> to vector<16x16xf32>
    %219 = arith.cmpf oeq, %218, %217 : vector<16x16xf32>
    %220 = arith.extui %219 : vector<16x16xi1> to vector<16x16xi32>
    %221 = arith.sitofp %220 : vector<16x16xi32> to vector<16x16xf32>
    %222 = tpu.iota {dimensions = array<i32: 0>} : vector<3x16xi32>
    %c0_i32_50 = arith.constant 0 : i32
    %223 = vector.broadcast %c0_i32_50 : i32 to vector<3x16xi32>
    %224 = arith.cmpi eq, %222, %223 : vector<3x16xi32>
    %225 = vector.shape_cast %43 : vector<1x16xf32> to vector<1x16xf32>
    %226 = vector.broadcast %225 : vector<1x16xf32> to vector<3x16xf32>
    %c1_i32_51 = arith.constant 1 : i32
    %227 = vector.broadcast %c1_i32_51 : i32 to vector<3x16xi32>
    %228 = arith.cmpi eq, %222, %227 : vector<3x16xi32>
    %229 = vector.shape_cast %62 : vector<1x16xf32> to vector<1x16xf32>
    %230 = vector.broadcast %229 : vector<1x16xf32> to vector<3x16xf32>
    %231 = vector.shape_cast %83 : vector<1x16xf32> to vector<1x16xf32>
    %232 = vector.broadcast %231 : vector<1x16xf32> to vector<3x16xf32>
    %233 = arith.select %228, %230, %232 : vector<3x16xi1>, vector<3x16xf32>
    %234 = arith.select %224, %226, %233 : vector<3x16xi1>, vector<3x16xf32>
    %cst_52 = arith.constant dense<0.000000e+00> : vector<3x16xf32>
    %235 = tpu.matmul %234, %221, %cst_52 {dimension_numbers = #tpu.dot_dimension_numbers<[1], [0], [0], [1], [0, 0, 1, 1], [], []>} : vector<3x16xf32>, vector<16x16xf32>, vector<3x16xf32> -> vector<3x16xf32>
    %cst_53 = arith.constant 0.000000e+00 : f32
    %236 = vector.broadcast %cst_53 : f32 to vector<1x14xf32>
    %237 = vector.broadcast %14 : f32 to vector<1x14xf32>
    %238 = arith.addf %236, %237 : vector<1x14xf32>
    %239 = vector.extract_strided_slice %235 {offsets = [0, 0], sizes = [1, 14], strides = [1, 1]} : vector<3x16xf32> to vector<1x14xf32>
    %240 = vector.broadcast %5 : f32 to vector<1x14xf32>
    %241 = arith.mulf %240, %239 : vector<1x14xf32>
    %242 = arith.addf %238, %241 : vector<1x14xf32>
    %243 = vector.extract_strided_slice %235 {offsets = [0, 1], sizes = [1, 14], strides = [1, 1]} : vector<3x16xf32> to vector<1x14xf32>
    %244 = vector.broadcast %6 : f32 to vector<1x14xf32>
    %245 = arith.mulf %244, %243 : vector<1x14xf32>
    %246 = arith.addf %242, %245 : vector<1x14xf32>
    %247 = vector.extract_strided_slice %235 {offsets = [0, 2], sizes = [1, 14], strides = [1, 1]} : vector<3x16xf32> to vector<1x14xf32>
    %248 = vector.broadcast %7 : f32 to vector<1x14xf32>
    %249 = arith.mulf %248, %247 : vector<1x14xf32>
    %250 = arith.addf %246, %249 : vector<1x14xf32>
    %251 = vector.extract_strided_slice %235 {offsets = [1, 0], sizes = [1, 14], strides = [1, 1]} : vector<3x16xf32> to vector<1x14xf32>
    %252 = vector.broadcast %8 : f32 to vector<1x14xf32>
    %253 = arith.mulf %252, %251 : vector<1x14xf32>
    %254 = arith.addf %250, %253 : vector<1x14xf32>
    %255 = vector.extract_strided_slice %235 {offsets = [1, 1], sizes = [1, 14], strides = [1, 1]} : vector<3x16xf32> to vector<1x14xf32>
    %256 = vector.broadcast %9 : f32 to vector<1x14xf32>
    %257 = arith.mulf %256, %255 : vector<1x14xf32>
    %258 = arith.addf %254, %257 : vector<1x14xf32>
    %259 = vector.extract_strided_slice %235 {offsets = [1, 2], sizes = [1, 14], strides = [1, 1]} : vector<3x16xf32> to vector<1x14xf32>
    %260 = vector.broadcast %10 : f32 to vector<1x14xf32>
    %261 = arith.mulf %260, %259 : vector<1x14xf32>
    %262 = arith.addf %258, %261 : vector<1x14xf32>
    %263 = vector.extract_strided_slice %235 {offsets = [2, 0], sizes = [1, 14], strides = [1, 1]} : vector<3x16xf32> to vector<1x14xf32>
    %264 = vector.broadcast %11 : f32 to vector<1x14xf32>
    %265 = arith.mulf %264, %263 : vector<1x14xf32>
    %266 = arith.addf %262, %265 : vector<1x14xf32>
    %267 = vector.extract_strided_slice %235 {offsets = [2, 1], sizes = [1, 14], strides = [1, 1]} : vector<3x16xf32> to vector<1x14xf32>
    %268 = vector.broadcast %12 : f32 to vector<1x14xf32>
    %269 = arith.mulf %268, %267 : vector<1x14xf32>
    %270 = arith.addf %266, %269 : vector<1x14xf32>
    %271 = vector.extract_strided_slice %235 {offsets = [2, 2], sizes = [1, 14], strides = [1, 1]} : vector<3x16xf32> to vector<1x14xf32>
    %272 = vector.broadcast %13 : f32 to vector<1x14xf32>
    %273 = arith.mulf %272, %271 : vector<1x14xf32>
    %274 = arith.addf %270, %273 : vector<1x14xf32>
    %275 = vector.extract_strided_slice %274 {offsets = [0, 0], sizes = [1, 12], strides = [1, 1]} : vector<1x14xf32> to vector<1x12xf32>
    %276 = vector.extract_strided_slice %274 {offsets = [0, 1], sizes = [1, 12], strides = [1, 1]} : vector<1x14xf32> to vector<1x12xf32>
    %277 = arith.maximumf %275, %276 : vector<1x12xf32>
    %278 = vector.extract_strided_slice %274 {offsets = [0, 2], sizes = [1, 12], strides = [1, 1]} : vector<1x14xf32> to vector<1x12xf32>
    %279 = arith.maximumf %277, %278 : vector<1x12xf32>
    %280 = vector.extract_strided_slice %279 {offsets = [0, 0], sizes = [1, 10], strides = [1, 1]} : vector<1x12xf32> to vector<1x10xf32>
    %281 = vector.broadcast %15 : f32 to vector<1x10xf32>
    %282 = arith.mulf %281, %280 : vector<1x10xf32>
    %283 = vector.extract_strided_slice %279 {offsets = [0, 1], sizes = [1, 10], strides = [1, 1]} : vector<1x12xf32> to vector<1x10xf32>
    %284 = vector.broadcast %16 : f32 to vector<1x10xf32>
    %285 = arith.mulf %284, %283 : vector<1x10xf32>
    %286 = arith.addf %282, %285 : vector<1x10xf32>
    %287 = vector.extract_strided_slice %279 {offsets = [0, 2], sizes = [1, 10], strides = [1, 1]} : vector<1x12xf32> to vector<1x10xf32>
    %288 = vector.broadcast %17 : f32 to vector<1x10xf32>
    %289 = arith.mulf %288, %287 : vector<1x10xf32>
    %290 = arith.addf %286, %289 : vector<1x10xf32>
    %291 = vector.broadcast %18 : f32 to vector<1x10xf32>
    %292 = arith.addf %290, %291 : vector<1x10xf32>
    %293 = vector.extract_strided_slice %292 {offsets = [0, 0], sizes = [1, 8], strides = [1, 1]} : vector<1x10xf32> to vector<1x8xf32>
    %294 = vector.extract_strided_slice %292 {offsets = [0, 1], sizes = [1, 8], strides = [1, 1]} : vector<1x10xf32> to vector<1x8xf32>
    %295 = arith.maximumf %293, %294 : vector<1x8xf32>
    %296 = vector.extract_strided_slice %292 {offsets = [0, 2], sizes = [1, 8], strides = [1, 1]} : vector<1x10xf32> to vector<1x8xf32>
    %297 = arith.maximumf %295, %296 : vector<1x8xf32>
    %c1_54 = arith.constant 1 : index
    %c0_55 = arith.constant 0 : index
    %c0_56 = arith.constant 0 : index
    %298 = vector.load %arg6[%c1_54, %c0_55, %c0_56] : memref<3x8x32xf32, #tpu.memory_space<vmem>>, vector<1x8x32xf32>
    %299 = vector.shape_cast %298 : vector<1x8x32xf32> to vector<8x32xf32>
    %cst_57 = arith.constant dense<0.000000e+00> : vector<1x32xf32>
    %300 = tpu.matmul %297, %299, %cst_57 {dimension_numbers = #tpu.dot_dimension_numbers<[1], [0], [0], [1], [0, 0, 1, 1], [], []>} : vector<1x8xf32>, vector<8x32xf32>, vector<1x32xf32> -> vector<1x32xf32>
    %301 = arith.addf %196, %300 : vector<1x32xf32>
    %302 = tpu.iota {dimensions = array<i32: 0>} : vector<16x16xi32>
    %303 = tpu.iota {dimensions = array<i32: 1>} : vector<16x16xi32>
    %304 = vector.shape_cast %90 : vector<1x16xf32> to vector<1x16xf32>
    %305 = vector.broadcast %304 : vector<1x16xf32> to vector<16x16xf32>
    %306 = arith.cmpi eq, %302, %303 : vector<16x16xi32>
    %cst_58 = arith.constant 0.000000e+00 : f32
    %307 = vector.broadcast %cst_58 : f32 to vector<16x16xf32>
    %308 = arith.select %306, %305, %307 : vector<16x16xi1>, vector<16x16xf32>
    %cst_59 = arith.constant dense<0.000000e+00> : vector<16xf32>
    %309 = vector.multi_reduction <add>, %308, %cst_59 [1] : vector<16x16xf32> to vector<16xf32>
    %310 = vector.shape_cast %309 : vector<16xf32> to vector<16x1xf32>
    %311 = vector.broadcast %310 : vector<16x1xf32> to vector<16x16xf32>
    %312 = arith.cmpf ogt, %305, %311 : vector<16x16xf32>
    %313 = vector.broadcast %310 : vector<16x1xf32> to vector<16x16xf32>
    %314 = arith.cmpf oeq, %305, %313 : vector<16x16xf32>
    %315 = arith.cmpi slt, %303, %302 : vector<16x16xi32>
    %316 = arith.andi %314, %315 : vector<16x16xi1>
    %317 = arith.ori %312, %316 : vector<16x16xi1>
    %318 = arith.extui %317 : vector<16x16xi1> to vector<16x16xi32>
    %319 = arith.sitofp %318 : vector<16x16xi32> to vector<16x16xf32>
    %cst_60 = arith.constant dense<0.000000e+00> : vector<16xf32>
    %320 = vector.multi_reduction <add>, %319, %cst_60 [1] : vector<16x16xf32> to vector<16xf32>
    %321 = vector.shape_cast %320 : vector<16xf32> to vector<16x1xf32>
    %322 = arith.sitofp %303 : vector<16x16xi32> to vector<16x16xf32>
    %323 = vector.broadcast %321 : vector<16x1xf32> to vector<16x16xf32>
    %324 = arith.cmpf oeq, %323, %322 : vector<16x16xf32>
    %325 = arith.extui %324 : vector<16x16xi1> to vector<16x16xi32>
    %326 = arith.sitofp %325 : vector<16x16xi32> to vector<16x16xf32>
    %327 = tpu.iota {dimensions = array<i32: 0>} : vector<3x16xi32>
    %c0_i32_61 = arith.constant 0 : i32
    %328 = vector.broadcast %c0_i32_61 : i32 to vector<3x16xi32>
    %329 = arith.cmpi eq, %327, %328 : vector<3x16xi32>
    %330 = vector.shape_cast %48 : vector<1x16xf32> to vector<1x16xf32>
    %331 = vector.broadcast %330 : vector<1x16xf32> to vector<3x16xf32>
    %c1_i32_62 = arith.constant 1 : i32
    %332 = vector.broadcast %c1_i32_62 : i32 to vector<3x16xi32>
    %333 = arith.cmpi eq, %327, %332 : vector<3x16xi32>
    %334 = vector.shape_cast %69 : vector<1x16xf32> to vector<1x16xf32>
    %335 = vector.broadcast %334 : vector<1x16xf32> to vector<3x16xf32>
    %336 = vector.shape_cast %90 : vector<1x16xf32> to vector<1x16xf32>
    %337 = vector.broadcast %336 : vector<1x16xf32> to vector<3x16xf32>
    %338 = arith.select %333, %335, %337 : vector<3x16xi1>, vector<3x16xf32>
    %339 = arith.select %329, %331, %338 : vector<3x16xi1>, vector<3x16xf32>
    %cst_63 = arith.constant dense<0.000000e+00> : vector<3x16xf32>
    %340 = tpu.matmul %339, %326, %cst_63 {dimension_numbers = #tpu.dot_dimension_numbers<[1], [0], [0], [1], [0, 0, 1, 1], [], []>} : vector<3x16xf32>, vector<16x16xf32>, vector<3x16xf32> -> vector<3x16xf32>
    %cst_64 = arith.constant 0.000000e+00 : f32
    %341 = vector.broadcast %cst_64 : f32 to vector<1x14xf32>
    %342 = vector.broadcast %14 : f32 to vector<1x14xf32>
    %343 = arith.addf %341, %342 : vector<1x14xf32>
    %344 = vector.extract_strided_slice %340 {offsets = [0, 0], sizes = [1, 14], strides = [1, 1]} : vector<3x16xf32> to vector<1x14xf32>
    %345 = vector.broadcast %5 : f32 to vector<1x14xf32>
    %346 = arith.mulf %345, %344 : vector<1x14xf32>
    %347 = arith.addf %343, %346 : vector<1x14xf32>
    %348 = vector.extract_strided_slice %340 {offsets = [0, 1], sizes = [1, 14], strides = [1, 1]} : vector<3x16xf32> to vector<1x14xf32>
    %349 = vector.broadcast %6 : f32 to vector<1x14xf32>
    %350 = arith.mulf %349, %348 : vector<1x14xf32>
    %351 = arith.addf %347, %350 : vector<1x14xf32>
    %352 = vector.extract_strided_slice %340 {offsets = [0, 2], sizes = [1, 14], strides = [1, 1]} : vector<3x16xf32> to vector<1x14xf32>
    %353 = vector.broadcast %7 : f32 to vector<1x14xf32>
    %354 = arith.mulf %353, %352 : vector<1x14xf32>
    %355 = arith.addf %351, %354 : vector<1x14xf32>
    %356 = vector.extract_strided_slice %340 {offsets = [1, 0], sizes = [1, 14], strides = [1, 1]} : vector<3x16xf32> to vector<1x14xf32>
    %357 = vector.broadcast %8 : f32 to vector<1x14xf32>
    %358 = arith.mulf %357, %356 : vector<1x14xf32>
    %359 = arith.addf %355, %358 : vector<1x14xf32>
    %360 = vector.extract_strided_slice %340 {offsets = [1, 1], sizes = [1, 14], strides = [1, 1]} : vector<3x16xf32> to vector<1x14xf32>
    %361 = vector.broadcast %9 : f32 to vector<1x14xf32>
    %362 = arith.mulf %361, %360 : vector<1x14xf32>
    %363 = arith.addf %359, %362 : vector<1x14xf32>
    %364 = vector.extract_strided_slice %340 {offsets = [1, 2], sizes = [1, 14], strides = [1, 1]} : vector<3x16xf32> to vector<1x14xf32>
    %365 = vector.broadcast %10 : f32 to vector<1x14xf32>
    %366 = arith.mulf %365, %364 : vector<1x14xf32>
    %367 = arith.addf %363, %366 : vector<1x14xf32>
    %368 = vector.extract_strided_slice %340 {offsets = [2, 0], sizes = [1, 14], strides = [1, 1]} : vector<3x16xf32> to vector<1x14xf32>
    %369 = vector.broadcast %11 : f32 to vector<1x14xf32>
    %370 = arith.mulf %369, %368 : vector<1x14xf32>
    %371 = arith.addf %367, %370 : vector<1x14xf32>
    %372 = vector.extract_strided_slice %340 {offsets = [2, 1], sizes = [1, 14], strides = [1, 1]} : vector<3x16xf32> to vector<1x14xf32>
    %373 = vector.broadcast %12 : f32 to vector<1x14xf32>
    %374 = arith.mulf %373, %372 : vector<1x14xf32>
    %375 = arith.addf %371, %374 : vector<1x14xf32>
    %376 = vector.extract_strided_slice %340 {offsets = [2, 2], sizes = [1, 14], strides = [1, 1]} : vector<3x16xf32> to vector<1x14xf32>
    %377 = vector.broadcast %13 : f32 to vector<1x14xf32>
    %378 = arith.mulf %377, %376 : vector<1x14xf32>
    %379 = arith.addf %375, %378 : vector<1x14xf32>
    %380 = vector.extract_strided_slice %379 {offsets = [0, 0], sizes = [1, 12], strides = [1, 1]} : vector<1x14xf32> to vector<1x12xf32>
    %381 = vector.extract_strided_slice %379 {offsets = [0, 1], sizes = [1, 12], strides = [1, 1]} : vector<1x14xf32> to vector<1x12xf32>
    %382 = arith.maximumf %380, %381 : vector<1x12xf32>
    %383 = vector.extract_strided_slice %379 {offsets = [0, 2], sizes = [1, 12], strides = [1, 1]} : vector<1x14xf32> to vector<1x12xf32>
    %384 = arith.maximumf %382, %383 : vector<1x12xf32>
    %385 = vector.extract_strided_slice %384 {offsets = [0, 0], sizes = [1, 10], strides = [1, 1]} : vector<1x12xf32> to vector<1x10xf32>
    %386 = vector.broadcast %15 : f32 to vector<1x10xf32>
    %387 = arith.mulf %386, %385 : vector<1x10xf32>
    %388 = vector.extract_strided_slice %384 {offsets = [0, 1], sizes = [1, 10], strides = [1, 1]} : vector<1x12xf32> to vector<1x10xf32>
    %389 = vector.broadcast %16 : f32 to vector<1x10xf32>
    %390 = arith.mulf %389, %388 : vector<1x10xf32>
    %391 = arith.addf %387, %390 : vector<1x10xf32>
    %392 = vector.extract_strided_slice %384 {offsets = [0, 2], sizes = [1, 10], strides = [1, 1]} : vector<1x12xf32> to vector<1x10xf32>
    %393 = vector.broadcast %17 : f32 to vector<1x10xf32>
    %394 = arith.mulf %393, %392 : vector<1x10xf32>
    %395 = arith.addf %391, %394 : vector<1x10xf32>
    %396 = vector.broadcast %18 : f32 to vector<1x10xf32>
    %397 = arith.addf %395, %396 : vector<1x10xf32>
    %398 = vector.extract_strided_slice %397 {offsets = [0, 0], sizes = [1, 8], strides = [1, 1]} : vector<1x10xf32> to vector<1x8xf32>
    %399 = vector.extract_strided_slice %397 {offsets = [0, 1], sizes = [1, 8], strides = [1, 1]} : vector<1x10xf32> to vector<1x8xf32>
    %400 = arith.maximumf %398, %399 : vector<1x8xf32>
    %401 = vector.extract_strided_slice %397 {offsets = [0, 2], sizes = [1, 8], strides = [1, 1]} : vector<1x10xf32> to vector<1x8xf32>
    %402 = arith.maximumf %400, %401 : vector<1x8xf32>
    %c2_65 = arith.constant 2 : index
    %c0_66 = arith.constant 0 : index
    %c0_67 = arith.constant 0 : index
    %403 = vector.load %arg6[%c2_65, %c0_66, %c0_67] : memref<3x8x32xf32, #tpu.memory_space<vmem>>, vector<1x8x32xf32>
    %404 = vector.shape_cast %403 : vector<1x8x32xf32> to vector<8x32xf32>
    %cst_68 = arith.constant dense<0.000000e+00> : vector<1x32xf32>
    %405 = tpu.matmul %402, %404, %cst_68 {dimension_numbers = #tpu.dot_dimension_numbers<[1], [0], [0], [1], [0, 0, 1, 1], [], []>} : vector<1x8xf32>, vector<8x32xf32>, vector<1x32xf32> -> vector<1x32xf32>
    %406 = arith.addf %301, %405 : vector<1x32xf32>
    %cst_69 = arith.constant 0.000000e+00 : f32
    %407 = vector.broadcast %cst_69 : f32 to vector<1x32xf32>
    %408 = arith.cmpf ogt, %406, %407 : vector<1x32xf32>
    %cst_70 = arith.constant 0.000000e+00 : f32
    %409 = vector.broadcast %cst_70 : f32 to vector<1x32xf32>
    %410 = arith.minimumf %406, %409 : vector<1x32xf32>
    %411 = math.exp %410 : vector<1x32xf32>
    %cst_71 = arith.constant 1.000000e+00 : f32
    %412 = vector.broadcast %cst_71 : f32 to vector<1x32xf32>
    %413 = arith.subf %411, %412 : vector<1x32xf32>
    %414 = arith.select %408, %406, %413 : vector<1x32xi1>, vector<1x32xf32>
    %c0_72 = arith.constant 0 : index
    %c0_73 = arith.constant 0 : index
    %415 = vector.load %arg8[%c0_72, %c0_73] : memref<32x6xf32, #tpu.memory_space<vmem>>, vector<32x6xf32>
    %cst_74 = arith.constant dense<0.000000e+00> : vector<1x6xf32>
    %416 = tpu.matmul %414, %415, %cst_74 {dimension_numbers = #tpu.dot_dimension_numbers<[1], [0], [0], [1], [0, 0, 1, 1], [], []>} : vector<1x32xf32>, vector<32x6xf32>, vector<1x6xf32> -> vector<1x6xf32>
    %c0_75 = arith.constant 0 : index
    %c0_76 = arith.constant 0 : index
    %417 = vector.load %arg9[%c0_75, %c0_76] : memref<1x6xf32, #tpu.memory_space<vmem>>, vector<1x6xf32>
    %418 = arith.addf %416, %417 : vector<1x6xf32>
    %cst_77 = arith.constant 0.000000e+00 : f32
    %419 = vector.broadcast %cst_77 : f32 to vector<1x6xf32>
    %420 = arith.cmpf ogt, %418, %419 : vector<1x6xf32>
    %cst_78 = arith.constant 0.000000e+00 : f32
    %421 = vector.broadcast %cst_78 : f32 to vector<1x6xf32>
    %422 = arith.minimumf %418, %421 : vector<1x6xf32>
    %423 = math.exp %422 : vector<1x6xf32>
    %cst_79 = arith.constant 1.000000e+00 : f32
    %424 = vector.broadcast %cst_79 : f32 to vector<1x6xf32>
    %425 = arith.subf %423, %424 : vector<1x6xf32>
    %426 = arith.select %420, %418, %425 : vector<1x6xi1>, vector<1x6xf32>
    %c0_80 = arith.constant 0 : index
    %c0_81 = arith.constant 0 : index
    %427 = vector.load %arg10[%c0_80, %c0_81] : memref<6x2xf32, #tpu.memory_space<vmem>>, vector<6x2xf32>
    %cst_82 = arith.constant dense<0.000000e+00> : vector<1x2xf32>
    %428 = tpu.matmul %426, %427, %cst_82 {dimension_numbers = #tpu.dot_dimension_numbers<[1], [0], [0], [1], [0, 0, 1, 1], [], []>} : vector<1x6xf32>, vector<6x2xf32>, vector<1x2xf32> -> vector<1x2xf32>
    %c0_83 = arith.constant 0 : index
    %c0_84 = arith.constant 0 : index
    %429 = vector.load %arg11[%c0_83, %c0_84] : memref<1x2xf32, #tpu.memory_space<vmem>>, vector<1x2xf32>
    %430 = arith.addf %428, %429 : vector<1x2xf32>
    %c0_85 = arith.constant 0 : index
    %c0_86 = arith.constant 0 : index
    %431 = vector.load %arg12[%c0_85, %c0_86] : memref<1x2xf32, #tpu.memory_space<vmem>>, vector<1x2xf32>
    tpu.vector_store %arg12[%c0_85, %c0_86], %430 {strides = array<i32>} : memref<1x2xf32, #tpu.memory_space<vmem>>, vector<1x2xf32>,
    return
  }
}

</mosaic_0001>

<llo_original>
// kernel: dgcnn_forward.1
$region0: #{dgcnn_forward.1}
  #allocation0 [shape = 'u32[]', space=smem, size = 0x4, offset = 0x4, fixed_abs, tag = 'smem constant byte address 0x4 - core index']
  #allocation1 [shape = 'u32[144,128]{1,0:T(1,128)}', space=vmem, size = 0x12000, scoped, tag = 'internal scratch']
  %s0 = inlined_call_operand.vmem [shape: f32[3,16,16], index: 0, kind: input, shape index: {}]
  %s1 = inlined_call_operand.vmem [shape: f32[3,1,16], index: 1, kind: input, shape index: {}]
  %s2 = inlined_call_operand.vmem [shape: f32[4,16], index: 2, kind: input, shape index: {}]
  %s3 = inlined_call_operand.vmem [shape: f32[1,4], index: 3, kind: input, shape index: {}]
  %s4 = inlined_call_operand.vmem [shape: f32[5], index: 4, kind: input, shape index: {}]
  %s5 = inlined_call_operand.vmem [shape: f32[14], index: 5, kind: input, shape index: {}]
  %s6 = inlined_call_operand.vmem [shape: f32[3,8,32], index: 6, kind: input, shape index: {}]
  %s7 = inlined_call_operand.vmem [shape: f32[1,32], index: 7, kind: input, shape index: {}]
  %s8 = inlined_call_operand.vmem [shape: f32[32,6], index: 8, kind: input, shape index: {}]
  %s9 = inlined_call_operand.vmem [shape: f32[1,6], index: 9, kind: input, shape index: {}]
  %s10 = inlined_call_operand.vmem [shape: f32[6,2], index: 10, kind: input, shape index: {}]
  %s11 = inlined_call_operand.vmem [shape: f32[1,2], index: 11, kind: input, shape index: {}]
  %s12 = inlined_call_operand.hbm [shape: f32[1,2], index: 12, kind: output, shape index: {}]
  %s13 = sld [smem:[#allocation0]]
  $region66: #{dgcnn_forward.1} parent=0
    _
  %s15 = ssub.s32 1, %s13
  %s16 = scalar_select 0, %s15, %s13
  $region1: #{dgcnn_forward.1} parent=0
    #allocation2 [shape = 'u8[512]{0}', space=smem, size = 0x200, scoped, tag = 'input window, operand 4, single buffered']
    #allocation3 [shape = 's32[1]{0}', space=sflag, size = 0x4, scoped, tag = 'scoped memory for dgcnn_forward.1']
    #allocation4 [shape = 's32[1]{0}', space=sflag, size = 0x4, scoped, tag = 'scoped memory for dgcnn_forward.1']
    #allocation5 [shape = 'u8[512]{0}', space=smem, size = 0x200, scoped, tag = 'input window, operand 5, single buffered']
    #allocation6 [shape = 's32[1]{0}', space=sflag, size = 0x4, scoped, tag = 'scoped memory for dgcnn_forward.1']
    #allocation7 [shape = 'u8[512]{0}', space=vmem, size = 0x400, scoped, tag = 'output window, operand 0, single buffered']
    %17 = vsyncpa [#allocation4], 0
    %18 = vsyncpa [#allocation6], 0
    %19 = vsyncpa [#allocation3], 0
    // Predicated region
    $region2: #{dgcnn_forward.1} parent=1 // pred_check
      _
    $region3: #{dgcnn_forward.1} parent=1 // pred_check_branch
      %21 = sbr.rel (0) target = $region5
    $region4: #{dgcnn_forward.1} parent=1 // pred_region
      _
    $region5: #{dgcnn_forward.1} parent=1 // pred_fallthru
      _
    // Predicated region
    $region6: #{dgcnn_forward.1} parent=1 // pred_check
      _
    $region7: #{dgcnn_forward.1} parent=1 // pred_check_branch
      %23 = sbr.rel (0) target = $region9
    $region8: #{dgcnn_forward.1} parent=1 // pred_region
      _
    $region9: #{dgcnn_forward.1} parent=1 // pred_fallthru
      _
    // Predicated region
    $region10: #{dgcnn_forward.1} parent=1 // pred_check
      _
    $region11: #{dgcnn_forward.1} parent=1 // pred_check_branch
      %25 = sbr.rel (0) target = $region13
    $region12: #{dgcnn_forward.1} parent=1 // pred_region
      _
    $region13: #{dgcnn_forward.1} parent=1 // pred_fallthru
      _
    // Predicated region
    $region14: #{dgcnn_forward.1} parent=1 // pred_check
      _
    $region15: #{dgcnn_forward.1} parent=1 // pred_check_branch
      %27 = sbr.rel (0) target = $region17
    $region16: #{dgcnn_forward.1} parent=1 // pred_region
      _
    $region17: #{dgcnn_forward.1} parent=1 // pred_fallthru
      _
    // Predicated region
    $region18: #{dgcnn_forward.1} parent=1 // pred_check
      _
    $region19: #{dgcnn_forward.1} parent=1 // pred_check_branch
      %29 = sbr.rel (0) target = $region21
    $region20: #{dgcnn_forward.1} parent=1 // pred_region
      %s31 = ssub.s32 16, 16
      %32 = vsyncadd [#allocation4], %s31
      %s34 = sshll.u32 %s4, 4
      %s35 = int_to_ptr.vmem [resolvable:$true] %s34
      %37 = dma.vmem_to_smem %s35, 16, [#allocation2], [#allocation4]
    $region21: #{dgcnn_forward.1} parent=1 // pred_fallthru
      _
    // Predicated region
    $region22: #{dgcnn_forward.1} parent=1 // pred_check
      _
    $region23: #{dgcnn_forward.1} parent=1 // pred_check_branch
      %39 = sbr.rel (0) target = $region25
    $region24: #{dgcnn_forward.1} parent=1 // pred_region
      %s41 = ssub.s32 16, 16
      %42 = vsyncadd [#allocation6], %s41
      %s44 = sshll.u32 %s5, 4
      %s45 = int_to_ptr.vmem [resolvable:$true] %s44
      %47 = dma.vmem_to_smem %s45, 16, [#allocation5], [#allocation6]
    $region25: #{dgcnn_forward.1} parent=1 // pred_fallthru
      _
    // Predicated region
    $region26: #{dgcnn_forward.1} parent=1 // pred_check
      _
    $region27: #{dgcnn_forward.1} parent=1 // pred_check_branch
      %49 = sbr.rel (0) target = $region29
    $region28: #{dgcnn_forward.1} parent=1 // pred_region
      _
    $region29: #{dgcnn_forward.1} parent=1 // pred_fallthru
      _
    // Predicated region
    $region30: #{dgcnn_forward.1} parent=1 // pred_check
      _
    $region31: #{dgcnn_forward.1} parent=1 // pred_check_branch
      %51 = sbr.rel (0) target = $region33
    $region32: #{dgcnn_forward.1} parent=1 // pred_region
      _
    $region33: #{dgcnn_forward.1} parent=1 // pred_fallthru
      _
    // Predicated region
    $region34: #{dgcnn_forward.1} parent=1 // pred_check
      _
    $region35: #{dgcnn_forward.1} parent=1 // pred_check_branch
      %53 = sbr.rel (0) target = $region37
    $region36: #{dgcnn_forward.1} parent=1 // pred_region
      _
    $region37: #{dgcnn_forward.1} parent=1 // pred_fallthru
      _
    // Predicated region
    $region38: #{dgcnn_forward.1} parent=1 // pred_check
      _
    $region39: #{dgcnn_forward.1} parent=1 // pred_check_branch
      %55 = sbr.rel (0) target = $region41
    $region40: #{dgcnn_forward.1} parent=1 // pred_region
      _
    $region41: #{dgcnn_forward.1} parent=1 // pred_fallthru
      _
    // Predicated region
    $region42: #{dgcnn_forward.1} parent=1 // pred_check
      _
    $region43: #{dgcnn_forward.1} parent=1 // pred_check_branch
      %57 = sbr.rel (0) target = $region45
    $region44: #{dgcnn_forward.1} parent=1 // pred_region
      _
    $region45: #{dgcnn_forward.1} parent=1 // pred_fallthru
      _
    // Predicated region
    $region46: #{dgcnn_forward.1} parent=1 // pred_check
      _
    $region47: #{dgcnn_forward.1} parent=1 // pred_check_branch
      %59 = sbr.rel (0) target = $region49
    $region48: #{dgcnn_forward.1} parent=1 // pred_region
      _
    $region49: #{dgcnn_forward.1} parent=1 // pred_fallthru
      _
    // Predicated region
    $region50: #{dgcnn_forward.1} parent=1 // pred_check
      _
    $region51: #{dgcnn_forward.1} parent=1 // pred_check_branch
      %61 = sbr.rel (0) target = $region53
    $region52: #{dgcnn_forward.1} parent=1 // pred_region
      %62 = dma.done [#allocation4], 16
    $region53: #{dgcnn_forward.1} parent=1 // pred_fallthru
      _
    // Predicated region
    $region54: #{dgcnn_forward.1} parent=1 // pred_check
      _
    $region55: #{dgcnn_forward.1} parent=1 // pred_check_branch
      %64 = sbr.rel (0) target = $region57
    $region56: #{dgcnn_forward.1} parent=1 // pred_region
      %65 = dma.done [#allocation6], 16
    $region57: #{dgcnn_forward.1} parent=1 // pred_fallthru
      _
    %66 = sfence
    %s67 = sld [smem:[#allocation2]]
    %s68 = sld [smem:[#allocation2 + $0x1]]
    %s69 = sld [smem:[#allocation2 + $0x2]]
    %s70 = sld [smem:[#allocation2 + $0x3]]
    %s71 = sld [smem:[#allocation2 + $0x4]]
    %s72 = sld [smem:[#allocation5]]
    %s73 = sld [smem:[#allocation5 + $0x1]]
    %s74 = sld [smem:[#allocation5 + $0x2]]
    %s75 = sld [smem:[#allocation5 + $0x3]]
    %s76 = sld [smem:[#allocation5 + $0x4]]
    %s77 = sld [smem:[#allocation5 + $0x5]]
    %s78 = sld [smem:[#allocation5 + $0x6]]
    %s79 = sld [smem:[#allocation5 + $0x7]]
    %s80 = sld [smem:[#allocation5 + $0x8]]
    %s81 = sld [smem:[#allocation5 + $0x9]]
    %s82 = sld [smem:[#allocation5 + $0xa]]
    %s83 = sld [smem:[#allocation5 + $0xb]]
    %s84 = sld [smem:[#allocation5 + $0xc]]
    %s85 = sld [smem:[#allocation5 + $0xd]]
    %v86 = vld [vmem:[%s3] sm:$0x1]
    %v87 = vld [vmem:[%s2] sm:$0xf]
    %vm88 = vcmask 31744
    %v90 = vsel %vm88, %v86, 0
    %vm92 = vcmask 1043456
    %v94 = vsel %vm92, %v87, 0
    %96 = vmatprep.subr.mxu0 0.0
    %97 = vmatpush1.msra.mxu0 %v94
    %98 = vmatprep.subr.mxu0 0.0
    %99 = vmatpush1.msra.mxu0 0.0
    %100 = vmatprep.subr.mxu0 0.0
    %101 = vmatpush1.msra.mxu0 0.0
    %102 = vmatprep.subr.mxu0 0.0
    %103 = vmatpush1.msra.mxu0 0.0
    %104 = vmatprep.subr.mxu0 0.0
    %105 = vmatpush1.msra.mxu0 0.0
    %106 = vmatprep.subr.mxu0 0.0
    %107 = vmatpush1.msra.mxu0 0.0
    %108 = vmatprep.subr.mxu0 0.0
    %109 = vmatpush1.msra.mxu0 0.0
    %110 = vmatprep.subr.mxu0 0.0
    %111 = vmatpush1.msra.mxu0 0.0
    %112 = vmatprep.subr.mxu0 0.0
    %113 = vmatpush1.msra.mxu0 0.0
    %114 = vmatprep.subr.mxu0 0.0
    %115 = vmatpush1.msra.mxu0 0.0
    %116 = vmatprep.subr.mxu0 0.0
    %117 = vmatpush1.msra.mxu0 0.0
    %118 = vmatprep.subr.mxu0 0.0
    %119 = vmatpush1.msra.mxu0 0.0
    %120 = vmatprep.subr.mxu0 0.0
    %121 = vmatpush1.msra.mxu0 0.0
    %122 = vmatprep.subr.mxu0 0.0
    %123 = vmatpush1.msra.mxu0 0.0
    %124 = vmatprep.subr.mxu0 0.0
    %125 = vmatpush1.msra.mxu0 0.0
    %126 = vmatprep.subr.mxu0 0.0
    %127 = vmatpush1.msra.mxu0 0.0
    %128 = vmatprep.subr.mxu0 0.0
    %129 = vmatpush1.msra.mxu0 0.0
    %130 = vmatprep.subr.mxu0 0.0
    %131 = vmatpush1.msra.mxu0 0.0
    %132 = vmatprep.subr.mxu0 0.0
    %133 = vmatpush1.msra.mxu0 0.0
    %134 = vmatprep.subr.mxu0 0.0
    %135 = vmatpush1.msra.mxu0 0.0
    %136 = vmatprep.subr.mxu0 0.0
    %137 = vmatpush1.msra.mxu0 0.0
    %138 = vmatprep.subr.mxu0 0.0
    %139 = vmatpush1.msra.mxu0 0.0
    %140 = vmatprep.subr.mxu0 0.0
    %141 = vmatpush1.msra.mxu0 0.0
    %142 = vmatprep.subr.mxu0 0.0
    %143 = vmatpush1.msra.mxu0 0.0
    %144 = vmatprep.subr.mxu0 0.0
    %145 = vmatpush1.msra.mxu0 0.0
    %146 = vmatprep.subr.mxu0 0.0
    %147 = vmatpush1.msra.mxu0 0.0
    %148 = vmatprep.subr.mxu0 0.0
    %149 = vmatpush1.msra.mxu0 0.0
    %150 = vmatprep.subr.mxu0 0.0
    %151 = vmatpush1.msra.mxu0 0.0
    %152 = vmatprep.subr.mxu0 0.0
    %153 = vmatpush1.msra.mxu0 0.0
    %154 = vmatprep.subr.mxu0 0.0
    %155 = vmatpush1.msra.mxu0 0.0
    %156 = vmatprep.subr.mxu0 0.0
    %157 = vmatpush1.msra.mxu0 0.0
    %158 = vmatprep.subr.mxu0 0.0
    %159 = vmatpush1.msra.mxu0 0.0
    %160 = vmatprep.mubr.f32.mxu0 0.0
    %161 = vmatmul.mubr.f32.gmra.mrb[0].mxu0 %v90
    %v162 = vpop.f32.mrb[0].mxu0
    %v163 = vadd.f32 0.0, %v162
    %v164 = vpop.f32.mrb[0].mxu0
    %165 = vdwg.mxu0
    %v166 = vld [vmem:[%s0] sm:$0xff]
    %v167 = vld [vmem:[%s0 + $0x8] sm:$0xff]
    %s168 = scalar_lea.vmem %s0, 16
    %v169 = vld [vmem:[%s168] sm:$0xff]
    %v170 = vld [vmem:[%s168 + $0x8] sm:$0xff]
    %s171 = scalar_lea.vmem %s0, 32
    %v172 = vld [vmem:[%s171] sm:$0xff]
    %v173 = vld [vmem:[%s171 + $0x8] sm:$0xff]
    %v174 = vld [vmem:[%s1] sm:$0x1]
    %s175 = scalar_lea.vmem %s1, 1
    %v176 = vld [vmem:[%s175] sm:$0x1]
    %s177 = scalar_lea.vmem %s1, 2
    %v178 = vld [vmem:[%s177] sm:$0x1]
    %v179 = vmul.f32 %v163, %v174
    %vm180 = vcmask 130048
    %v182 = vsel %vm180, %v179, 0
    %184 = vmatprep.subr.mxu0 0.0
    %185 = vmatpush1.msra.mxu0 %v166
    %186 = vmatprep.subr.mxu0 0.0
    %187 = vmatpush1.msra.mxu0 %v167
    %188 = vmatprep.subr.mxu0 0.0
    %189 = vmatpush1.msra.mxu0 0.0
    %190 = vmatprep.subr.mxu0 0.0
    %191 = vmatpush1.msra.mxu0 0.0
    %192 = vmatprep.subr.mxu0 0.0
    %193 = vmatpush1.msra.mxu0 0.0
    %194 = vmatprep.subr.mxu0 0.0
    %195 = vmatpush1.msra.mxu0 0.0
    %196 = vmatprep.subr.mxu0 0.0
    %197 = vmatpush1.msra.mxu0 0.0
    %198 = vmatprep.subr.mxu0 0.0
    %199 = vmatpush1.msra.mxu0 0.0
    %200 = vmatprep.subr.mxu0 0.0
    %201 = vmatpush1.msra.mxu0 0.0
    %202 = vmatprep.subr.mxu0 0.0
    %203 = vmatpush1.msra.mxu0 0.0
    %204 = vmatprep.subr.mxu0 0.0
    %205 = vmatpush1.msra.mxu0 0.0
    %206 = vmatprep.subr.mxu0 0.0
    %207 = vmatpush1.msra.mxu0 0.0
    %208 = vmatprep.subr.mxu0 0.0
    %209 = vmatpush1.msra.mxu0 0.0
    %210 = vmatprep.subr.mxu0 0.0
    %211 = vmatpush1.msra.mxu0 0.0
    %212 = vmatprep.subr.mxu0 0.0
    %213 = vmatpush1.msra.mxu0 0.0
    %214 = vmatprep.subr.mxu0 0.0
    %215 = vmatpush1.msra.mxu0 0.0
    %216 = vmatprep.subr.mxu0 0.0
    %217 = vmatpush1.msra.mxu0 0.0
    %218 = vmatprep.subr.mxu0 0.0
    %219 = vmatpush1.msra.mxu0 0.0
    %220 = vmatprep.subr.mxu0 0.0
    %221 = vmatpush1.msra.mxu0 0.0
    %222 = vmatprep.subr.mxu0 0.0
    %223 = vmatpush1.msra.mxu0 0.0
    %224 = vmatprep.subr.mxu0 0.0
    %225 = vmatpush1.msra.mxu0 0.0
    %226 = vmatprep.subr.mxu0 0.0
    %227 = vmatpush1.msra.mxu0 0.0
    %228 = vmatprep.subr.mxu0 0.0
    %229 = vmatpush1.msra.mxu0 0.0
    %230 = vmatprep.subr.mxu0 0.0
    %231 = vmatpush1.msra.mxu0 0.0
    %232 = vmatprep.subr.mxu0 0.0
    %233 = vmatpush1.msra.mxu0 0.0
    %234 = vmatprep.subr.mxu0 0.0
    %235 = vmatpush1.msra.mxu0 0.0
    %236 = vmatprep.subr.mxu0 0.0
    %237 = vmatpush1.msra.mxu0 0.0
    %238 = vmatprep.subr.mxu0 0.0
    %239 = vmatpush1.msra.mxu0 0.0
    %240 = vmatprep.subr.mxu0 0.0
    %241 = vmatpush1.msra.mxu0 0.0
    %242 = vmatprep.subr.mxu0 0.0
    %243 = vmatpush1.msra.mxu0 0.0
    %244 = vmatprep.subr.mxu0 0.0
    %245 = vmatpush1.msra.mxu0 0.0
    %246 = vmatprep.subr.mxu0 0.0
    %247 = vmatpush1.msra.mxu0 0.0
    %248 = vmatprep.mubr.f32.mxu0 0.0
    %249 = vmatmul.mubr.f32.gmra.mrb[0].mxu0 %v182
    %v250 = vpop.f32.mrb[0].mxu0
    %v251 = vadd.f32 0.0, %v250
    %v252 = vpop.f32.mrb[0].mxu0
    %253 = vdwg.mxu0
    %v254 = vmul.f32 %v251, %v174
    %v255 = vstv %s67
    %v256 = vadd.f32 %v254, %v255
    %v257 = vmul.f32 %v163, %v176
    %v259 = vsel %vm180, %v257, 0
    %261 = vmatprep.subr.mxu0 0.0
    %262 = vmatpush1.msra.mxu0 %v169
    %263 = vmatprep.subr.mxu0 0.0
    %264 = vmatpush1.msra.mxu0 %v170
    %265 = vmatprep.subr.mxu0 0.0
    %266 = vmatpush1.msra.mxu0 0.0
    %267 = vmatprep.subr.mxu0 0.0
    %268 = vmatpush1.msra.mxu0 0.0
    %269 = vmatprep.subr.mxu0 0.0
    %270 = vmatpush1.msra.mxu0 0.0
    %271 = vmatprep.subr.mxu0 0.0
    %272 = vmatpush1.msra.mxu0 0.0
    %273 = vmatprep.subr.mxu0 0.0
    %274 = vmatpush1.msra.mxu0 0.0
    %275 = vmatprep.subr.mxu0 0.0
    %276 = vmatpush1.msra.mxu0 0.0
    %277 = vmatprep.subr.mxu0 0.0
    %278 = vmatpush1.msra.mxu0 0.0
    %279 = vmatprep.subr.mxu0 0.0
    %280 = vmatpush1.msra.mxu0 0.0
    %281 = vmatprep.subr.mxu0 0.0
    %282 = vmatpush1.msra.mxu0 0.0
    %283 = vmatprep.subr.mxu0 0.0
    %284 = vmatpush1.msra.mxu0 0.0
    %285 = vmatprep.subr.mxu0 0.0
    %286 = vmatpush1.msra.mxu0 0.0
    %287 = vmatprep.subr.mxu0 0.0
    %288 = vmatpush1.msra.mxu0 0.0
    %289 = vmatprep.subr.mxu0 0.0
    %290 = vmatpush1.msra.mxu0 0.0
    %291 = vmatprep.subr.mxu0 0.0
    %292 = vmatpush1.msra.mxu0 0.0
    %293 = vmatprep.subr.mxu0 0.0
    %294 = vmatpush1.msra.mxu0 0.0
    %295 = vmatprep.subr.mxu0 0.0
    %296 = vmatpush1.msra.mxu0 0.0
    %297 = vmatprep.subr.mxu0 0.0
    %298 = vmatpush1.msra.mxu0 0.0
    %299 = vmatprep.subr.mxu0 0.0
    %300 = vmatpush1.msra.mxu0 0.0
    %301 = vmatprep.subr.mxu0 0.0
    %302 = vmatpush1.msra.mxu0 0.0
    %303 = vmatprep.subr.mxu0 0.0
    %304 = vmatpush1.msra.mxu0 0.0
    %305 = vmatprep.subr.mxu0 0.0
    %306 = vmatpush1.msra.mxu0 0.0
    %307 = vmatprep.subr.mxu0 0.0
    %308 = vmatpush1.msra.mxu0 0.0
    %309 = vmatprep.subr.mxu0 0.0
    %310 = vmatpush1.msra.mxu0 0.0
    %311 = vmatprep.subr.mxu0 0.0
    %312 = vmatpush1.msra.mxu0 0.0
    %313 = vmatprep.subr.mxu0 0.0
    %314 = vmatpush1.msra.mxu0 0.0
    %315 = vmatprep.subr.mxu0 0.0
    %316 = vmatpush1.msra.mxu0 0.0
    %317 = vmatprep.subr.mxu0 0.0
    %318 = vmatpush1.msra.mxu0 0.0
    %319 = vmatprep.subr.mxu0 0.0
    %320 = vmatpush1.msra.mxu0 0.0
    %321 = vmatprep.subr.mxu0 0.0
    %322 = vmatpush1.msra.mxu0 0.0
    %323 = vmatprep.subr.mxu0 0.0
    %324 = vmatpush1.msra.mxu0 0.0
    %325 = vmatprep.mubr.f32.mxu0 0.0
    %326 = vmatmul.mubr.f32.gmra.mrb[0].mxu0 %v259
    %v327 = vpop.f32.mrb[0].mxu0
    %v328 = vadd.f32 0.0, %v327
    %v329 = vpop.f32.mrb[0].mxu0
    %330 = vdwg.mxu0
    %v331 = vmul.f32 %v328, %v176
    %v332 = vadd.f32 %v331, %v255
    %v333 = vmul.f32 %v163, %v178
    %v335 = vsel %vm180, %v333, 0
    %337 = vmatprep.subr.mxu0 0.0
    %338 = vmatpush1.msra.mxu0 %v172
    %339 = vmatprep.subr.mxu0 0.0
    %340 = vmatpush1.msra.mxu0 %v173
    %341 = vmatprep.subr.mxu0 0.0
    %342 = vmatpush1.msra.mxu0 0.0
    %343 = vmatprep.subr.mxu0 0.0
    %344 = vmatpush1.msra.mxu0 0.0
    %345 = vmatprep.subr.mxu0 0.0
    %346 = vmatpush1.msra.mxu0 0.0
    %347 = vmatprep.subr.mxu0 0.0
    %348 = vmatpush1.msra.mxu0 0.0
    %349 = vmatprep.subr.mxu0 0.0
    %350 = vmatpush1.msra.mxu0 0.0
    %351 = vmatprep.subr.mxu0 0.0
    %352 = vmatpush1.msra.mxu0 0.0
    %353 = vmatprep.subr.mxu0 0.0
    %354 = vmatpush1.msra.mxu0 0.0
    %355 = vmatprep.subr.mxu0 0.0
    %356 = vmatpush1.msra.mxu0 0.0
    %357 = vmatprep.subr.mxu0 0.0
    %358 = vmatpush1.msra.mxu0 0.0
    %359 = vmatprep.subr.mxu0 0.0
    %360 = vmatpush1.msra.mxu0 0.0
    %361 = vmatprep.subr.mxu0 0.0
    %362 = vmatpush1.msra.mxu0 0.0
    %363 = vmatprep.subr.mxu0 0.0
    %364 = vmatpush1.msra.mxu0 0.0
    %365 = vmatprep.subr.mxu0 0.0
    %366 = vmatpush1.msra.mxu0 0.0
    %367 = vmatprep.subr.mxu0 0.0
    %368 = vmatpush1.msra.mxu0 0.0
    %369 = vmatprep.subr.mxu0 0.0
    %370 = vmatpush1.msra.mxu0 0.0
    %371 = vmatprep.subr.mxu0 0.0
    %372 = vmatpush1.msra.mxu0 0.0
    %373 = vmatprep.subr.mxu0 0.0
    %374 = vmatpush1.msra.mxu0 0.0
    %375 = vmatprep.subr.mxu0 0.0
    %376 = vmatpush1.msra.mxu0 0.0
    %377 = vmatprep.subr.mxu0 0.0
    %378 = vmatpush1.msra.mxu0 0.0
    %379 = vmatprep.subr.mxu0 0.0
    %380 = vmatpush1.msra.mxu0 0.0
    %381 = vmatprep.subr.mxu0 0.0
    %382 = vmatpush1.msra.mxu0 0.0
    %383 = vmatprep.subr.mxu0 0.0
    %384 = vmatpush1.msra.mxu0 0.0
    %385 = vmatprep.subr.mxu0 0.0
    %386 = vmatpush1.msra.mxu0 0.0
    %387 = vmatprep.subr.mxu0 0.0
    %388 = vmatpush1.msra.mxu0 0.0
    %389 = vmatprep.subr.mxu0 0.0
    %390 = vmatpush1.msra.mxu0 0.0
    %391 = vmatprep.subr.mxu0 0.0
    %392 = vmatpush1.msra.mxu0 0.0
    %393 = vmatprep.subr.mxu0 0.0
    %394 = vmatpush1.msra.mxu0 0.0
    %395 = vmatprep.subr.mxu0 0.0
    %396 = vmatpush1.msra.mxu0 0.0
    %397 = vmatprep.subr.mxu0 0.0
    %398 = vmatpush1.msra.mxu0 0.0
    %399 = vmatprep.subr.mxu0 0.0
    %400 = vmatpush1.msra.mxu0 0.0
    %401 = vmatprep.mubr.f32.mxu0 0.0
    %402 = vmatmul.mubr.f32.gmra.mrb[0].mxu0 %v335
    %v403 = vpop.f32.mrb[0].mxu0
    %v404 = vadd.f32 0.0, %v403
    %v405 = vpop.f32.mrb[0].mxu0
    %406 = vdwg.mxu0
    %v407 = vmul.f32 %v404, %v178
    %v408 = vadd.f32 %v407, %v255
    %v409 = vmul.f32 %v256, %v174
    %v411 = vsel %vm180, %v409, 0
    %413 = vmatprep.subr.mxu0 0.0
    %414 = vmatpush1.msra.mxu0 %v166
    %415 = vmatprep.subr.mxu0 0.0
    %416 = vmatpush1.msra.mxu0 %v167
    %417 = vmatprep.subr.mxu0 0.0
    %418 = vmatpush1.msra.mxu0 0.0
    %419 = vmatprep.subr.mxu0 0.0
    %420 = vmatpush1.msra.mxu0 0.0
    %421 = vmatprep.subr.mxu0 0.0
    %422 = vmatpush1.msra.mxu0 0.0
    %423 = vmatprep.subr.mxu0 0.0
    %424 = vmatpush1.msra.mxu0 0.0
    %425 = vmatprep.subr.mxu0 0.0
    %426 = vmatpush1.msra.mxu0 0.0
    %427 = vmatprep.subr.mxu0 0.0
    %428 = vmatpush1.msra.mxu0 0.0
    %429 = vmatprep.subr.mxu0 0.0
    %430 = vmatpush1.msra.mxu0 0.0
    %431 = vmatprep.subr.mxu0 0.0
    %432 = vmatpush1.msra.mxu0 0.0
    %433 = vmatprep.subr.mxu0 0.0
    %434 = vmatpush1.msra.mxu0 0.0
    %435 = vmatprep.subr.mxu0 0.0
    %436 = vmatpush1.msra.mxu0 0.0
    %437 = vmatprep.subr.mxu0 0.0
    %438 = vmatpush1.msra.mxu0 0.0
    %439 = vmatprep.subr.mxu0 0.0
    %440 = vmatpush1.msra.mxu0 0.0
    %441 = vmatprep.subr.mxu0 0.0
    %442 = vmatpush1.msra.mxu0 0.0
    %443 = vmatprep.subr.mxu0 0.0
    %444 = vmatpush1.msra.mxu0 0.0
    %445 = vmatprep.subr.mxu0 0.0
    %446 = vmatpush1.msra.mxu0 0.0
    %447 = vmatprep.subr.mxu0 0.0
    %448 = vmatpush1.msra.mxu0 0.0
    %449 = vmatprep.subr.mxu0 0.0
    %450 = vmatpush1.msra.mxu0 0.0
    %451 = vmatprep.subr.mxu0 0.0
    %452 = vmatpush1.msra.mxu0 0.0
    %453 = vmatprep.subr.mxu0 0.0
    %454 = vmatpush1.msra.mxu0 0.0
    %455 = vmatprep.subr.mxu0 0.0
    %456 = vmatpush1.msra.mxu0 0.0
    %457 = vmatprep.subr.mxu0 0.0
    %458 = vmatpush1.msra.mxu0 0.0
    %459 = vmatprep.subr.mxu0 0.0
    %460 = vmatpush1.msra.mxu0 0.0
    %461 = vmatprep.subr.mxu0 0.0
    %462 = vmatpush1.msra.mxu0 0.0
    %463 = vmatprep.subr.mxu0 0.0
    %464 = vmatpush1.msra.mxu0 0.0
    %465 = vmatprep.subr.mxu0 0.0
    %466 = vmatpush1.msra.mxu0 0.0
    %467 = vmatprep.subr.mxu0 0.0
    %468 = vmatpush1.msra.mxu0 0.0
    %469 = vmatprep.subr.mxu0 0.0
    %470 = vmatpush1.msra.mxu0 0.0
    %471 = vmatprep.subr.mxu0 0.0
    %472 = vmatpush1.msra.mxu0 0.0
    %473 = vmatprep.subr.mxu0 0.0
    %474 = vmatpush1.msra.mxu0 0.0
    %475 = vmatprep.subr.mxu0 0.0
    %476 = vmatpush1.msra.mxu0 0.0
    %477 = vmatprep.mubr.f32.mxu0 0.0
    %478 = vmatmul.mubr.f32.gmra.mrb[0].mxu0 %v411
    %v479 = vpop.f32.mrb[0].mxu0
    %v480 = vadd.f32 0.0, %v479
    %v481 = vpop.f32.mrb[0].mxu0
    %482 = vdwg.mxu0
    %v483 = vmul.f32 %v480, %v174
    %v484 = vstv %s68
    %v485 = vmul.f32 %v484, %v483
    %v486 = vstv %s69
    %v487 = vadd.f32 %v485, %v486
    %v488 = vmul.f32 %v332, %v176
    %v490 = vsel %vm180, %v488, 0
    %492 = vmatprep.subr.mxu0 0.0
    %493 = vmatpush1.msra.mxu0 %v169
    %494 = vmatprep.subr.mxu0 0.0
    %495 = vmatpush1.msra.mxu0 %v170
    %496 = vmatprep.subr.mxu0 0.0
    %497 = vmatpush1.msra.mxu0 0.0
    %498 = vmatprep.subr.mxu0 0.0
    %499 = vmatpush1.msra.mxu0 0.0
    %500 = vmatprep.subr.mxu0 0.0
    %501 = vmatpush1.msra.mxu0 0.0
    %502 = vmatprep.subr.mxu0 0.0
    %503 = vmatpush1.msra.mxu0 0.0
    %504 = vmatprep.subr.mxu0 0.0
    %505 = vmatpush1.msra.mxu0 0.0
    %506 = vmatprep.subr.mxu0 0.0
    %507 = vmatpush1.msra.mxu0 0.0
    %508 = vmatprep.subr.mxu0 0.0
    %509 = vmatpush1.msra.mxu0 0.0
    %510 = vmatprep.subr.mxu0 0.0
    %511 = vmatpush1.msra.mxu0 0.0
    %512 = vmatprep.subr.mxu0 0.0
    %513 = vmatpush1.msra.mxu0 0.0
    %514 = vmatprep.subr.mxu0 0.0
    %515 = vmatpush1.msra.mxu0 0.0
    %516 = vmatprep.subr.mxu0 0.0
    %517 = vmatpush1.msra.mxu0 0.0
    %518 = vmatprep.subr.mxu0 0.0
    %519 = vmatpush1.msra.mxu0 0.0
    %520 = vmatprep.subr.mxu0 0.0
    %521 = vmatpush1.msra.mxu0 0.0
    %522 = vmatprep.subr.mxu0 0.0
    %523 = vmatpush1.msra.mxu0 0.0
    %524 = vmatprep.subr.mxu0 0.0
    %525 = vmatpush1.msra.mxu0 0.0
    %526 = vmatprep.subr.mxu0 0.0
    %527 = vmatpush1.msra.mxu0 0.0
    %528 = vmatprep.subr.mxu0 0.0
    %529 = vmatpush1.msra.mxu0 0.0
    %530 = vmatprep.subr.mxu0 0.0
    %531 = vmatpush1.msra.mxu0 0.0
    %532 = vmatprep.subr.mxu0 0.0
    %533 = vmatpush1.msra.mxu0 0.0
    %534 = vmatprep.subr.mxu0 0.0
    %535 = vmatpush1.msra.mxu0 0.0
    %536 = vmatprep.subr.mxu0 0.0
    %537 = vmatpush1.msra.mxu0 0.0
    %538 = vmatprep.subr.mxu0 0.0
    %539 = vmatpush1.msra.mxu0 0.0
    %540 = vmatprep.subr.mxu0 0.0
    %541 = vmatpush1.msra.mxu0 0.0
    %542 = vmatprep.subr.mxu0 0.0
    %543 = vmatpush1.msra.mxu0 0.0
    %544 = vmatprep.subr.mxu0 0.0
    %545 = vmatpush1.msra.mxu0 0.0
    %546 = vmatprep.subr.mxu0 0.0
    %547 = vmatpush1.msra.mxu0 0.0
    %548 = vmatprep.subr.mxu0 0.0
    %549 = vmatpush1.msra.mxu0 0.0
    %550 = vmatprep.subr.mxu0 0.0
    %551 = vmatpush1.msra.mxu0 0.0
    %552 = vmatprep.subr.mxu0 0.0
    %553 = vmatpush1.msra.mxu0 0.0
    %554 = vmatprep.subr.mxu0 0.0
    %555 = vmatpush1.msra.mxu0 0.0
    %556 = vmatprep.mubr.f32.mxu0 0.0
    %557 = vmatmul.mubr.f32.gmra.mrb[0].mxu0 %v490
    %v558 = vpop.f32.mrb[0].mxu0
    %v559 = vadd.f32 0.0, %v558
    %v560 = vpop.f32.mrb[0].mxu0
    %561 = vdwg.mxu0
    %v562 = vmul.f32 %v559, %v176
    %v563 = vmul.f32 %v484, %v562
    %v564 = vadd.f32 %v563, %v486
    %v565 = vmul.f32 %v408, %v178
    %v567 = vsel %vm180, %v565, 0
    %569 = vmatprep.subr.mxu0 0.0
    %570 = vmatpush1.msra.mxu0 %v172
    %571 = vmatprep.subr.mxu0 0.0
    %572 = vmatpush1.msra.mxu0 %v173
    %573 = vmatprep.subr.mxu0 0.0
    %574 = vmatpush1.msra.mxu0 0.0
    %575 = vmatprep.subr.mxu0 0.0
    %576 = vmatpush1.msra.mxu0 0.0
    %577 = vmatprep.subr.mxu0 0.0
    %578 = vmatpush1.msra.mxu0 0.0
    %579 = vmatprep.subr.mxu0 0.0
    %580 = vmatpush1.msra.mxu0 0.0
    %581 = vmatprep.subr.mxu0 0.0
    %582 = vmatpush1.msra.mxu0 0.0
    %583 = vmatprep.subr.mxu0 0.0
    %584 = vmatpush1.msra.mxu0 0.0
    %585 = vmatprep.subr.mxu0 0.0
    %586 = vmatpush1.msra.mxu0 0.0
    %587 = vmatprep.subr.mxu0 0.0
    %588 = vmatpush1.msra.mxu0 0.0
    %589 = vmatprep.subr.mxu0 0.0
    %590 = vmatpush1.msra.mxu0 0.0
    %591 = vmatprep.subr.mxu0 0.0
    %592 = vmatpush1.msra.mxu0 0.0
    %593 = vmatprep.subr.mxu0 0.0
    %594 = vmatpush1.msra.mxu0 0.0
    %595 = vmatprep.subr.mxu0 0.0
    %596 = vmatpush1.msra.mxu0 0.0
    %597 = vmatprep.subr.mxu0 0.0
    %598 = vmatpush1.msra.mxu0 0.0
    %599 = vmatprep.subr.mxu0 0.0
    %600 = vmatpush1.msra.mxu0 0.0
    %601 = vmatprep.subr.mxu0 0.0
    %602 = vmatpush1.msra.mxu0 0.0
    %603 = vmatprep.subr.mxu0 0.0
    %604 = vmatpush1.msra.mxu0 0.0
    %605 = vmatprep.subr.mxu0 0.0
    %606 = vmatpush1.msra.mxu0 0.0
    %607 = vmatprep.subr.mxu0 0.0
    %608 = vmatpush1.msra.mxu0 0.0
    %609 = vmatprep.subr.mxu0 0.0
    %610 = vmatpush1.msra.mxu0 0.0
    %611 = vmatprep.subr.mxu0 0.0
    %612 = vmatpush1.msra.mxu0 0.0
    %613 = vmatprep.subr.mxu0 0.0
    %614 = vmatpush1.msra.mxu0 0.0
    %615 = vmatprep.subr.mxu0 0.0
    %616 = vmatpush1.msra.mxu0 0.0
    %617 = vmatprep.subr.mxu0 0.0
    %618 = vmatpush1.msra.mxu0 0.0
    %619 = vmatprep.subr.mxu0 0.0
    %620 = vmatpush1.msra.mxu0 0.0
    %621 = vmatprep.subr.mxu0 0.0
    %622 = vmatpush1.msra.mxu0 0.0
    %623 = vmatprep.subr.mxu0 0.0
    %624 = vmatpush1.msra.mxu0 0.0
    %625 = vmatprep.subr.mxu0 0.0
    %626 = vmatpush1.msra.mxu0 0.0
    %627 = vmatprep.subr.mxu0 0.0
    %628 = vmatpush1.msra.mxu0 0.0
    %629 = vmatprep.subr.mxu0 0.0
    %630 = vmatpush1.msra.mxu0 0.0
    %631 = vmatprep.subr.mxu0 0.0
    %632 = vmatpush1.msra.mxu0 0.0
    %633 = vmatprep.mubr.f32.mxu0 0.0
    %634 = vmatmul.mubr.f32.gmra.mrb[0].mxu0 %v567
    %v635 = vpop.f32.mrb[0].mxu0
    %v636 = vadd.f32 0.0, %v635
    %v637 = vpop.f32.mrb[0].mxu0
    %638 = vdwg.mxu0
    %v639 = vmul.f32 %v636, %v178
    %v640 = vmul.f32 %v484, %v639
    %v641 = vadd.f32 %v640, %v486
    %v642 = vmul.f32 %v487, %v174
    %v644 = vsel %vm180, %v642, 0
    %646 = vmatprep.subr.mxu0 0.0
    %647 = vmatpush1.msra.mxu0 %v166
    %648 = vmatprep.subr.mxu0 0.0
    %649 = vmatpush1.msra.mxu0 %v167
    %650 = vmatprep.subr.mxu0 0.0
    %651 = vmatpush1.msra.mxu0 0.0
    %652 = vmatprep.subr.mxu0 0.0
    %653 = vmatpush1.msra.mxu0 0.0
    %654 = vmatprep.subr.mxu0 0.0
    %655 = vmatpush1.msra.mxu0 0.0
    %656 = vmatprep.subr.mxu0 0.0
    %657 = vmatpush1.msra.mxu0 0.0
    %658 = vmatprep.subr.mxu0 0.0
    %659 = vmatpush1.msra.mxu0 0.0
    %660 = vmatprep.subr.mxu0 0.0
    %661 = vmatpush1.msra.mxu0 0.0
    %662 = vmatprep.subr.mxu0 0.0
    %663 = vmatpush1.msra.mxu0 0.0
    %664 = vmatprep.subr.mxu0 0.0
    %665 = vmatpush1.msra.mxu0 0.0
    %666 = vmatprep.subr.mxu0 0.0
    %667 = vmatpush1.msra.mxu0 0.0
    %668 = vmatprep.subr.mxu0 0.0
    %669 = vmatpush1.msra.mxu0 0.0
    %670 = vmatprep.subr.mxu0 0.0
    %671 = vmatpush1.msra.mxu0 0.0
    %672 = vmatprep.subr.mxu0 0.0
    %673 = vmatpush1.msra.mxu0 0.0
    %674 = vmatprep.subr.mxu0 0.0
    %675 = vmatpush1.msra.mxu0 0.0
    %676 = vmatprep.subr.mxu0 0.0
    %677 = vmatpush1.msra.mxu0 0.0
    %678 = vmatprep.subr.mxu0 0.0
    %679 = vmatpush1.msra.mxu0 0.0
    %680 = vmatprep.subr.mxu0 0.0
    %681 = vmatpush1.msra.mxu0 0.0
    %682 = vmatprep.subr.mxu0 0.0
    %683 = vmatpush1.msra.mxu0 0.0
    %684 = vmatprep.subr.mxu0 0.0
    %685 = vmatpush1.msra.mxu0 0.0
    %686 = vmatprep.subr.mxu0 0.0
    %687 = vmatpush1.msra.mxu0 0.0
    %688 = vmatprep.subr.mxu0 0.0
    %689 = vmatpush1.msra.mxu0 0.0
    %690 = vmatprep.subr.mxu0 0.0
    %691 = vmatpush1.msra.mxu0 0.0
    %692 = vmatprep.subr.mxu0 0.0
    %693 = vmatpush1.msra.mxu0 0.0
    %694 = vmatprep.subr.mxu0 0.0
    %695 = vmatpush1.msra.mxu0 0.0
    %696 = vmatprep.subr.mxu0 0.0
    %697 = vmatpush1.msra.mxu0 0.0
    %698 = vmatprep.subr.mxu0 0.0
    %699 = vmatpush1.msra.mxu0 0.0
    %700 = vmatprep.subr.mxu0 0.0
    %701 = vmatpush1.msra.mxu0 0.0
    %702 = vmatprep.subr.mxu0 0.0
    %703 = vmatpush1.msra.mxu0 0.0
    %704 = vmatprep.subr.mxu0 0.0
    %705 = vmatpush1.msra.mxu0 0.0
    %706 = vmatprep.subr.mxu0 0.0
    %707 = vmatpush1.msra.mxu0 0.0
    %708 = vmatprep.subr.mxu0 0.0
    %709 = vmatpush1.msra.mxu0 0.0
    %710 = vmatprep.mubr.f32.mxu0 0.0
    %711 = vmatmul.mubr.f32.gmra.mrb[0].mxu0 %v644
    %v712 = vpop.f32.mrb[0].mxu0
    %v713 = vadd.f32 0.0, %v712
    %v714 = vpop.f32.mrb[0].mxu0
    %715 = vdwg.mxu0
    %v716 = vmul.f32 %v713, %v174
    %v717 = vstv %s70
    %v718 = vmul.f32 %v717, %v716
    %v719 = vstv %s71
    %v720 = vadd.f32 %v718, %v719
    %v721 = vmul.f32 %v564, %v176
    %v723 = vsel %vm180, %v721, 0
    %725 = vmatprep.subr.mxu0 0.0
    %726 = vmatpush1.msra.mxu0 %v169
    %727 = vmatprep.subr.mxu0 0.0
    %728 = vmatpush1.msra.mxu0 %v170
    %729 = vmatprep.subr.mxu0 0.0
    %730 = vmatpush1.msra.mxu0 0.0
    %731 = vmatprep.subr.mxu0 0.0
    %732 = vmatpush1.msra.mxu0 0.0
    %733 = vmatprep.subr.mxu0 0.0
    %734 = vmatpush1.msra.mxu0 0.0
    %735 = vmatprep.subr.mxu0 0.0
    %736 = vmatpush1.msra.mxu0 0.0
    %737 = vmatprep.subr.mxu0 0.0
    %738 = vmatpush1.msra.mxu0 0.0
    %739 = vmatprep.subr.mxu0 0.0
    %740 = vmatpush1.msra.mxu0 0.0
    %741 = vmatprep.subr.mxu0 0.0
    %742 = vmatpush1.msra.mxu0 0.0
    %743 = vmatprep.subr.mxu0 0.0
    %744 = vmatpush1.msra.mxu0 0.0
    %745 = vmatprep.subr.mxu0 0.0
    %746 = vmatpush1.msra.mxu0 0.0
    %747 = vmatprep.subr.mxu0 0.0
    %748 = vmatpush1.msra.mxu0 0.0
    %749 = vmatprep.subr.mxu0 0.0
    %750 = vmatpush1.msra.mxu0 0.0
    %751 = vmatprep.subr.mxu0 0.0
    %752 = vmatpush1.msra.mxu0 0.0
    %753 = vmatprep.subr.mxu0 0.0
    %754 = vmatpush1.msra.mxu0 0.0
    %755 = vmatprep.subr.mxu0 0.0
    %756 = vmatpush1.msra.mxu0 0.0
    %757 = vmatprep.subr.mxu0 0.0
    %758 = vmatpush1.msra.mxu0 0.0
    %759 = vmatprep.subr.mxu0 0.0
    %760 = vmatpush1.msra.mxu0 0.0
    %761 = vmatprep.subr.mxu0 0.0
    %762 = vmatpush1.msra.mxu0 0.0
    %763 = vmatprep.subr.mxu0 0.0
    %764 = vmatpush1.msra.mxu0 0.0
    %765 = vmatprep.subr.mxu0 0.0
    %766 = vmatpush1.msra.mxu0 0.0
    %767 = vmatprep.subr.mxu0 0.0
    %768 = vmatpush1.msra.mxu0 0.0
    %769 = vmatprep.subr.mxu0 0.0
    %770 = vmatpush1.msra.mxu0 0.0
    %771 = vmatprep.subr.mxu0 0.0
    %772 = vmatpush1.msra.mxu0 0.0
    %773 = vmatprep.subr.mxu0 0.0
    %774 = vmatpush1.msra.mxu0 0.0
    %775 = vmatprep.subr.mxu0 0.0
    %776 = vmatpush1.msra.mxu0 0.0
    %777 = vmatprep.subr.mxu0 0.0
    %778 = vmatpush1.msra.mxu0 0.0
    %779 = vmatprep.subr.mxu0 0.0
    %780 = vmatpush1.msra.mxu0 0.0
    %781 = vmatprep.subr.mxu0 0.0
    %782 = vmatpush1.msra.mxu0 0.0
    %783 = vmatprep.subr.mxu0 0.0
    %784 = vmatpush1.msra.mxu0 0.0
    %785 = vmatprep.subr.mxu0 0.0
    %786 = vmatpush1.msra.mxu0 0.0
    %787 = vmatprep.subr.mxu0 0.0
    %788 = vmatpush1.msra.mxu0 0.0
    %789 = vmatprep.mubr.f32.mxu0 0.0
    %790 = vmatmul.mubr.f32.gmra.mrb[0].mxu0 %v723
    %v791 = vpop.f32.mrb[0].mxu0
    %v792 = vadd.f32 0.0, %v791
    %v793 = vpop.f32.mrb[0].mxu0
    %794 = vdwg.mxu0
    %v795 = vmul.f32 %v792, %v176
    %v796 = vmul.f32 %v717, %v795
    %v797 = vadd.f32 %v796, %v719
    %v798 = vmul.f32 %v641, %v178
    %v800 = vsel %vm180, %v798, 0
    %802 = vmatprep.subr.mxu0 0.0
    %803 = vmatpush1.msra.mxu0 %v172
    %804 = vmatprep.subr.mxu0 0.0
    %805 = vmatpush1.msra.mxu0 %v173
    %806 = vmatprep.subr.mxu0 0.0
    %807 = vmatpush1.msra.mxu0 0.0
    %808 = vmatprep.subr.mxu0 0.0
    %809 = vmatpush1.msra.mxu0 0.0
    %810 = vmatprep.subr.mxu0 0.0
    %811 = vmatpush1.msra.mxu0 0.0
    %812 = vmatprep.subr.mxu0 0.0
    %813 = vmatpush1.msra.mxu0 0.0
    %814 = vmatprep.subr.mxu0 0.0
    %815 = vmatpush1.msra.mxu0 0.0
    %816 = vmatprep.subr.mxu0 0.0
    %817 = vmatpush1.msra.mxu0 0.0
    %818 = vmatprep.subr.mxu0 0.0
    %819 = vmatpush1.msra.mxu0 0.0
    %820 = vmatprep.subr.mxu0 0.0
    %821 = vmatpush1.msra.mxu0 0.0
    %822 = vmatprep.subr.mxu0 0.0
    %823 = vmatpush1.msra.mxu0 0.0
    %824 = vmatprep.subr.mxu0 0.0
    %825 = vmatpush1.msra.mxu0 0.0
    %826 = vmatprep.subr.mxu0 0.0
    %827 = vmatpush1.msra.mxu0 0.0
    %828 = vmatprep.subr.mxu0 0.0
    %829 = vmatpush1.msra.mxu0 0.0
    %830 = vmatprep.subr.mxu0 0.0
    %831 = vmatpush1.msra.mxu0 0.0
    %832 = vmatprep.subr.mxu0 0.0
    %833 = vmatpush1.msra.mxu0 0.0
    %834 = vmatprep.subr.mxu0 0.0
    %835 = vmatpush1.msra.mxu0 0.0
    %836 = vmatprep.subr.mxu0 0.0
    %837 = vmatpush1.msra.mxu0 0.0
    %838 = vmatprep.subr.mxu0 0.0
    %839 = vmatpush1.msra.mxu0 0.0
    %840 = vmatprep.subr.mxu0 0.0
    %841 = vmatpush1.msra.mxu0 0.0
    %842 = vmatprep.subr.mxu0 0.0
    %843 = vmatpush1.msra.mxu0 0.0
    %844 = vmatprep.subr.mxu0 0.0
    %845 = vmatpush1.msra.mxu0 0.0
    %846 = vmatprep.subr.mxu0 0.0
    %847 = vmatpush1.msra.mxu0 0.0
    %848 = vmatprep.subr.mxu0 0.0
    %849 = vmatpush1.msra.mxu0 0.0
    %850 = vmatprep.subr.mxu0 0.0
    %851 = vmatpush1.msra.mxu0 0.0
    %852 = vmatprep.subr.mxu0 0.0
    %853 = vmatpush1.msra.mxu0 0.0
    %854 = vmatprep.subr.mxu0 0.0
    %855 = vmatpush1.msra.mxu0 0.0
    %856 = vmatprep.subr.mxu0 0.0
    %857 = vmatpush1.msra.mxu0 0.0
    %858 = vmatprep.subr.mxu0 0.0
    %859 = vmatpush1.msra.mxu0 0.0
    %860 = vmatprep.subr.mxu0 0.0
    %861 = vmatpush1.msra.mxu0 0.0
    %862 = vmatprep.subr.mxu0 0.0
    %863 = vmatpush1.msra.mxu0 0.0
    %864 = vmatprep.subr.mxu0 0.0
    %865 = vmatpush1.msra.mxu0 0.0
    %866 = vmatprep.mubr.f32.mxu0 0.0
    %867 = vmatmul.mubr.f32.gmra.mrb[0].mxu0 %v800
    %v868 = vpop.f32.mrb[0].mxu0
    %v869 = vadd.f32 0.0, %v868
    %v870 = vpop.f32.mrb[0].mxu0
    %871 = vdwg.mxu0
    %v872 = vmul.f32 %v869, %v178
    %v873 = vmul.f32 %v717, %v872
    %v874 = vadd.f32 %v873, %v719
    %v875 = vld [vmem:[%s7] sm:$0x1]
    %v876 = vlaneseq
    %v877 = vshrl.u32 %v876, 7
    %v878 = vadd.s32 %v877, 8
    %v879 = vlaneseq
    %v880 = vand.u32 %v879, 127
    %v881 = vlaneseq
    %v882 = vshrl.u32 %v881, 7
    %v883 = vsub.s32 0, %v882
    %v884 = vrot.slane %v720, %v883
    %vm885 = vcmp.eq.s32.totalorder %v877, %v880
    %vm886 = vcmp.eq.s32.totalorder %v878, %v880
    %v887 = vsel %vm885, %v884, 0.0
    %v888 = vsel %vm886, %v884, 0.0
    %v889 = vsel %vm180, %v887, 0.0
    %890 = vadd.xlane.f32.xlu0 %v889
    %v891 = vpop.xlane.xlu0 %890
    %v892 = vsel %vm180, %v888, 0.0
    %893 = vadd.xlane.f32.xlu0 %v892
    %v894 = vpop.xlane.xlu0 %893
    %vm895 = vcmp.gt.f32.partialorder %v884, %v891
    %vm896 = vcmp.gt.f32.partialorder %v884, %v894
    %vm897 = vcmp.eq.f32.partialorder %v884, %v891
    %vm898 = vcmp.eq.f32.partialorder %v884, %v894
    %vm899 = vcmp.lt.s32.totalorder %v880, %v877
    %vm900 = vcmp.lt.s32.totalorder %v880, %v878
    %vm901 = vmand %vm897, %vm899
    %vm902 = vmand %vm898, %vm900
    %vm903 = vmor %vm895, %vm901
    %vm904 = vmor %vm896, %vm902
    %v905 = vsel %vm903, 1, 0
    %v906 = vsel %vm904, 1, 0
    %v907 = vcvt.s32.f32 %v905
    %v908 = vcvt.s32.f32 %v906
    %v909 = vsel %vm180, %v907, 0.0
    %910 = vadd.xlane.f32.xlu0 %v909
    %v911 = vpop.xlane.xlu0 %910
    %v912 = vsel %vm180, %v908, 0.0
    %913 = vadd.xlane.f32.xlu0 %v912
    %v914 = vpop.xlane.xlu0 %913
    %v915 = vcvt.s32.f32 %v880
    %vm916 = vcmp.eq.f32.partialorder %v911, %v915
    %vm917 = vcmp.eq.f32.partialorder %v914, %v915
    %v918 = vsel %vm916, 1, 0
    %v919 = vsel %vm917, 1, 0
    %v920 = vcvt.s32.f32 %v918
    %v921 = vcvt.s32.f32 %v919
    %vm922 = vcmp.eq.s32.totalorder %v877, 0
    %v923 = vlaneseq
    %v924 = vshrl.u32 %v923, 7
    %v925 = vsub.s32 0, %v924
    %v926 = vrot.slane %v256, %v925
    %vm927 = vcmp.eq.s32.totalorder %v877, 1
    %v928 = vlaneseq
    %v929 = vshrl.u32 %v928, 7
    %v930 = vsub.s32 0, %v929
    %v931 = vrot.slane %v487, %v930
    %v932 = vsel %vm927, %v931, %v884
    %v933 = vsel %vm922, %v926, %v932
    %v935 = vsel %vm180, %v933, 0
    %937 = vmatprep.subr.mxu0 0.0
    %938 = vmatpush1.msra.mxu0 %v920
    %939 = vmatprep.subr.mxu0 0.0
    %940 = vmatpush1.msra.mxu0 %v921
    %941 = vmatprep.subr.mxu0 0.0
    %942 = vmatpush1.msra.mxu0 0.0
    %943 = vmatprep.subr.mxu0 0.0
    %944 = vmatpush1.msra.mxu0 0.0
    %945 = vmatprep.subr.mxu0 0.0
    %946 = vmatpush1.msra.mxu0 0.0
    %947 = vmatprep.subr.mxu0 0.0
    %948 = vmatpush1.msra.mxu0 0.0
    %949 = vmatprep.subr.mxu0 0.0
    %950 = vmatpush1.msra.mxu0 0.0
    %951 = vmatprep.subr.mxu0 0.0
    %952 = vmatpush1.msra.mxu0 0.0
    %953 = vmatprep.subr.mxu0 0.0
    %954 = vmatpush1.msra.mxu0 0.0
    %955 = vmatprep.subr.mxu0 0.0
    %956 = vmatpush1.msra.mxu0 0.0
    %957 = vmatprep.subr.mxu0 0.0
    %958 = vmatpush1.msra.mxu0 0.0
    %959 = vmatprep.subr.mxu0 0.0
    %960 = vmatpush1.msra.mxu0 0.0
    %961 = vmatprep.subr.mxu0 0.0
    %962 = vmatpush1.msra.mxu0 0.0
    %963 = vmatprep.subr.mxu0 0.0
    %964 = vmatpush1.msra.mxu0 0.0
    %965 = vmatprep.subr.mxu0 0.0
    %966 = vmatpush1.msra.mxu0 0.0
    %967 = vmatprep.subr.mxu0 0.0
    %968 = vmatpush1.msra.mxu0 0.0
    %969 = vmatprep.subr.mxu0 0.0
    %970 = vmatpush1.msra.mxu0 0.0
    %971 = vmatprep.subr.mxu0 0.0
    %972 = vmatpush1.msra.mxu0 0.0
    %973 = vmatprep.subr.mxu0 0.0
    %974 = vmatpush1.msra.mxu0 0.0
    %975 = vmatprep.subr.mxu0 0.0
    %976 = vmatpush1.msra.mxu0 0.0
    %977 = vmatprep.subr.mxu0 0.0
    %978 = vmatpush1.msra.mxu0 0.0
    %979 = vmatprep.subr.mxu0 0.0
    %980 = vmatpush1.msra.mxu0 0.0
    %981 = vmatprep.subr.mxu0 0.0
    %982 = vmatpush1.msra.mxu0 0.0
    %983 = vmatprep.subr.mxu0 0.0
    %984 = vmatpush1.msra.mxu0 0.0
    %985 = vmatprep.subr.mxu0 0.0
    %986 = vmatpush1.msra.mxu0 0.0
    %987 = vmatprep.subr.mxu0 0.0
    %988 = vmatpush1.msra.mxu0 0.0
    %989 = vmatprep.subr.mxu0 0.0
    %990 = vmatpush1.msra.mxu0 0.0
    %991 = vmatprep.subr.mxu0 0.0
    %992 = vmatpush1.msra.mxu0 0.0
    %993 = vmatprep.subr.mxu0 0.0
    %994 = vmatpush1.msra.mxu0 0.0
    %995 = vmatprep.subr.mxu0 0.0
    %996 = vmatpush1.msra.mxu0 0.0
    %997 = vmatprep.subr.mxu0 0.0
    %998 = vmatpush1.msra.mxu0 0.0
    %999 = vmatprep.subr.mxu0 0.0
    %1000 = vmatpush1.msra.mxu0 0.0
    %1001 = vmatprep.mubr.f32.mxu0 0.0
    %1002 = vmatmul.mubr.f32.gmra.mrb[0].mxu0 %v935
    %v1003 = vpop.f32.mrb[0].mxu0
    %v1004 = vadd.f32 0.0, %v1003
    %v1005 = vpop.f32.mrb[0].mxu0
    %1006 = vdwg.mxu0
    %v1007 = vstv %s81
    %v1008 = vadd.f32 %v1007, 0.0
    %v1009 = vstv %s72
    %v1010 = vmul.f32 %v1009, %v1004
    %v1011 = vadd.f32 %v1008, %v1010
    %v1012 = vstv %s73
    %v1013 = vmul.f32 %v1012, %v1004
    %1015 = vrot.lane.b32.xlu0 %v1013, 127
    %v1016 = vpop.permute.xlu0 %1015
    %v1018 = vadd.f32 %v1011, %v1016
    %v1019 = vstv %s74
    %v1020 = vmul.f32 %v1019, %v1004
    %1022 = vrot.lane.b32.xlu0 %v1020, 126
    %v1023 = vpop.permute.xlu0 %1022
    %v1025 = vadd.f32 %v1018, %v1023
    %v1026 = vstv %s75
    %v1027 = vmul.f32 %v1026, %v1004
    %v1029 = vrot.slane %v1027, 1
    %v1031 = vadd.f32 %v1025, %v1029
    %v1032 = vstv %s76
    %v1033 = vmul.f32 %v1032, %v1004
    %v1035 = vrot.slane %v1033, 1
    %1036 = vrot.lane.b32.xlu0 %v1035, 127
    %v1037 = vpop.permute.xlu0 %1036
    %v1039 = vadd.f32 %v1031, %v1037
    %v1040 = vstv %s77
    %v1041 = vmul.f32 %v1040, %v1004
    %v1043 = vrot.slane %v1041, 1
    %1044 = vrot.lane.b32.xlu0 %v1043, 126
    %v1045 = vpop.permute.xlu0 %1044
    %v1047 = vadd.f32 %v1039, %v1045
    %v1048 = vstv %s78
    %v1049 = vmul.f32 %v1048, %v1004
    %v1051 = vrot.slane %v1049, 2
    %v1053 = vadd.f32 %v1047, %v1051
    %v1054 = vstv %s79
    %v1055 = vmul.f32 %v1054, %v1004
    %v1057 = vrot.slane %v1055, 2
    %1058 = vrot.lane.b32.xlu0 %v1057, 127
    %v1059 = vpop.permute.xlu0 %1058
    %v1061 = vadd.f32 %v1053, %v1059
    %v1062 = vstv %s80
    %v1063 = vmul.f32 %v1062, %v1004
    %v1065 = vrot.slane %v1063, 2
    %1066 = vrot.lane.b32.xlu0 %v1065, 126
    %v1067 = vpop.permute.xlu0 %1066
    %v1069 = vadd.f32 %v1061, %v1067
    %1071 = vrot.lane.b32.xlu0 %v1069, 127
    %v1072 = vpop.permute.xlu0 %1071
    %v1074 = vmax.f32 %v1069, %v1072
    %1075 = vrot.lane.b32.xlu0 %v1069, 126
    %v1076 = vpop.permute.xlu0 %1075
    %v1078 = vmax.f32 %v1074, %v1076
    %v1079 = vstv %s82
    %v1080 = vmul.f32 %v1079, %v1078
    %v1081 = vstv %s83
    %v1082 = vmul.f32 %v1081, %v1078
    %1084 = vrot.lane.b32.xlu0 %v1082, 127
    %v1085 = vpop.permute.xlu0 %1084
    %v1087 = vadd.f32 %v1080, %v1085
    %v1088 = vstv %s84
    %v1089 = vmul.f32 %v1088, %v1078
    %1091 = vrot.lane.b32.xlu0 %v1089, 126
    %v1092 = vpop.permute.xlu0 %1091
    %v1094 = vadd.f32 %v1087, %v1092
    %v1095 = vstv %s85
    %v1096 = vadd.f32 %v1094, %v1095
    %1098 = vrot.lane.b32.xlu0 %v1096, 127
    %v1099 = vpop.permute.xlu0 %1098
    %v1101 = vmax.f32 %v1096, %v1099
    %1102 = vrot.lane.b32.xlu0 %v1096, 126
    %v1103 = vpop.permute.xlu0 %1102
    %v1105 = vmax.f32 %v1101, %v1103
    %v1106 = vld [vmem:[%s6] sm:$0xff]
    %vm1107 = vcmask 64512
    %v1109 = vsel %vm1107, %v1105, 0
    %1111 = vmatprep.subr.mxu0 0.0
    %1112 = vmatpush1.msra.mxu0 %v1106
    %1113 = vmatprep.subr.mxu0 0.0
    %1114 = vmatpush1.msra.mxu0 0.0
    %1115 = vmatprep.subr.mxu0 0.0
    %1116 = vmatpush1.msra.mxu0 0.0
    %1117 = vmatprep.subr.mxu0 0.0
    %1118 = vmatpush1.msra.mxu0 0.0
    %1119 = vmatprep.subr.mxu0 0.0
    %1120 = vmatpush1.msra.mxu0 0.0
    %1121 = vmatprep.subr.mxu0 0.0
    %1122 = vmatpush1.msra.mxu0 0.0
    %1123 = vmatprep.subr.mxu0 0.0
    %1124 = vmatpush1.msra.mxu0 0.0
    %1125 = vmatprep.subr.mxu0 0.0
    %1126 = vmatpush1.msra.mxu0 0.0
    %1127 = vmatprep.subr.mxu0 0.0
    %1128 = vmatpush1.msra.mxu0 0.0
    %1129 = vmatprep.subr.mxu0 0.0
    %1130 = vmatpush1.msra.mxu0 0.0
    %1131 = vmatprep.subr.mxu0 0.0
    %1132 = vmatpush1.msra.mxu0 0.0
    %1133 = vmatprep.subr.mxu0 0.0
    %1134 = vmatpush1.msra.mxu0 0.0
    %1135 = vmatprep.subr.mxu0 0.0
    %1136 = vmatpush1.msra.mxu0 0.0
    %1137 = vmatprep.subr.mxu0 0.0
    %1138 = vmatpush1.msra.mxu0 0.0
    %1139 = vmatprep.subr.mxu0 0.0
    %1140 = vmatpush1.msra.mxu0 0.0
    %1141 = vmatprep.subr.mxu0 0.0
    %1142 = vmatpush1.msra.mxu0 0.0
    %1143 = vmatprep.subr.mxu0 0.0
    %1144 = vmatpush1.msra.mxu0 0.0
    %1145 = vmatprep.subr.mxu0 0.0
    %1146 = vmatpush1.msra.mxu0 0.0
    %1147 = vmatprep.subr.mxu0 0.0
    %1148 = vmatpush1.msra.mxu0 0.0
    %1149 = vmatprep.subr.mxu0 0.0
    %1150 = vmatpush1.msra.mxu0 0.0
    %1151 = vmatprep.subr.mxu0 0.0
    %1152 = vmatpush1.msra.mxu0 0.0
    %1153 = vmatprep.subr.mxu0 0.0
    %1154 = vmatpush1.msra.mxu0 0.0
    %1155 = vmatprep.subr.mxu0 0.0
    %1156 = vmatpush1.msra.mxu0 0.0
    %1157 = vmatprep.subr.mxu0 0.0
    %1158 = vmatpush1.msra.mxu0 0.0
    %1159 = vmatprep.subr.mxu0 0.0
    %1160 = vmatpush1.msra.mxu0 0.0
    %1161 = vmatprep.subr.mxu0 0.0
    %1162 = vmatpush1.msra.mxu0 0.0
    %1163 = vmatprep.subr.mxu0 0.0
    %1164 = vmatpush1.msra.mxu0 0.0
    %1165 = vmatprep.subr.mxu0 0.0
    %1166 = vmatpush1.msra.mxu0 0.0
    %1167 = vmatprep.subr.mxu0 0.0
    %1168 = vmatpush1.msra.mxu0 0.0
    %1169 = vmatprep.subr.mxu0 0.0
    %1170 = vmatpush1.msra.mxu0 0.0
    %1171 = vmatprep.subr.mxu0 0.0
    %1172 = vmatpush1.msra.mxu0 0.0
    %1173 = vmatprep.subr.mxu0 0.0
    %1174 = vmatpush1.msra.mxu0 0.0
    %1175 = vmatprep.mubr.f32.mxu0 0.0
    %1176 = vmatmul.mubr.f32.gmra.mrb[0].mxu0 %v1109
    %v1177 = vpop.f32.mrb[0].mxu0
    %v1178 = vadd.f32 0.0, %v1177
    %v1179 = vpop.f32.mrb[0].mxu0
    %1180 = vdwg.mxu0
    %v1181 = vadd.f32 %v875, %v1178
    %v1182 = vlaneseq
    %v1183 = vshrl.u32 %v1182, 7
    %v1184 = vsub.s32 0, %v1183
    %v1185 = vrot.slane %v797, %v1184
    %v1186 = vsel %vm885, %v1185, 0.0
    %v1187 = vsel %vm886, %v1185, 0.0
    %v1188 = vsel %vm180, %v1186, 0.0
    %1189 = vadd.xlane.f32.xlu0 %v1188
    %v1190 = vpop.xlane.xlu0 %1189
    %v1191 = vsel %vm180, %v1187, 0.0
    %1192 = vadd.xlane.f32.xlu0 %v1191
    %v1193 = vpop.xlane.xlu0 %1192
    %vm1194 = vcmp.gt.f32.partialorder %v1185, %v1190
    %vm1195 = vcmp.gt.f32.partialorder %v1185, %v1193
    %vm1196 = vcmp.eq.f32.partialorder %v1185, %v1190
    %vm1197 = vcmp.eq.f32.partialorder %v1185, %v1193
    %vm1198 = vmand %vm1196, %vm899
    %vm1199 = vmand %vm1197, %vm900
    %vm1200 = vmor %vm1194, %vm1198
    %vm1201 = vmor %vm1195, %vm1199
    %v1202 = vsel %vm1200, 1, 0
    %v1203 = vsel %vm1201, 1, 0
    %v1204 = vcvt.s32.f32 %v1202
    %v1205 = vcvt.s32.f32 %v1203
    %v1206 = vsel %vm180, %v1204, 0.0
    %1207 = vadd.xlane.f32.xlu0 %v1206
    %v1208 = vpop.xlane.xlu0 %1207
    %v1209 = vsel %vm180, %v1205, 0.0
    %1210 = vadd.xlane.f32.xlu0 %v1209
    %v1211 = vpop.xlane.xlu0 %1210
    %vm1212 = vcmp.eq.f32.partialorder %v1208, %v915
    %vm1213 = vcmp.eq.f32.partialorder %v1211, %v915
    %v1214 = vsel %vm1212, 1, 0
    %v1215 = vsel %vm1213, 1, 0
    %v1216 = vcvt.s32.f32 %v1214
    %v1217 = vcvt.s32.f32 %v1215
    %v1218 = vlaneseq
    %v1219 = vshrl.u32 %v1218, 7
    %v1220 = vsub.s32 0, %v1219
    %v1221 = vrot.slane %v332, %v1220
    %v1222 = vlaneseq
    %v1223 = vshrl.u32 %v1222, 7
    %v1224 = vsub.s32 0, %v1223
    %v1225 = vrot.slane %v564, %v1224
    %v1226 = vsel %vm927, %v1225, %v1185
    %v1227 = vsel %vm922, %v1221, %v1226
    %v1229 = vsel %vm180, %v1227, 0
    %1231 = vmatprep.subr.mxu0 0.0
    %1232 = vmatpush1.msra.mxu0 %v1216
    %1233 = vmatprep.subr.mxu0 0.0
    %1234 = vmatpush1.msra.mxu0 %v1217
    %1235 = vmatprep.subr.mxu0 0.0
    %1236 = vmatpush1.msra.mxu0 0.0
    %1237 = vmatprep.subr.mxu0 0.0
    %1238 = vmatpush1.msra.mxu0 0.0
    %1239 = vmatprep.subr.mxu0 0.0
    %1240 = vmatpush1.msra.mxu0 0.0
    %1241 = vmatprep.subr.mxu0 0.0
    %1242 = vmatpush1.msra.mxu0 0.0
    %1243 = vmatprep.subr.mxu0 0.0
    %1244 = vmatpush1.msra.mxu0 0.0
    %1245 = vmatprep.subr.mxu0 0.0
    %1246 = vmatpush1.msra.mxu0 0.0
    %1247 = vmatprep.subr.mxu0 0.0
    %1248 = vmatpush1.msra.mxu0 0.0
    %1249 = vmatprep.subr.mxu0 0.0
    %1250 = vmatpush1.msra.mxu0 0.0
    %1251 = vmatprep.subr.mxu0 0.0
    %1252 = vmatpush1.msra.mxu0 0.0
    %1253 = vmatprep.subr.mxu0 0.0
    %1254 = vmatpush1.msra.mxu0 0.0
    %1255 = vmatprep.subr.mxu0 0.0
    %1256 = vmatpush1.msra.mxu0 0.0
    %1257 = vmatprep.subr.mxu0 0.0
    %1258 = vmatpush1.msra.mxu0 0.0
    %1259 = vmatprep.subr.mxu0 0.0
    %1260 = vmatpush1.msra.mxu0 0.0
    %1261 = vmatprep.subr.mxu0 0.0
    %1262 = vmatpush1.msra.mxu0 0.0
    %1263 = vmatprep.subr.mxu0 0.0
    %1264 = vmatpush1.msra.mxu0 0.0
    %1265 = vmatprep.subr.mxu0 0.0
    %1266 = vmatpush1.msra.mxu0 0.0
    %1267 = vmatprep.subr.mxu0 0.0
    %1268 = vmatpush1.msra.mxu0 0.0
    %1269 = vmatprep.subr.mxu0 0.0
    %1270 = vmatpush1.msra.mxu0 0.0
    %1271 = vmatprep.subr.mxu0 0.0
    %1272 = vmatpush1.msra.mxu0 0.0
    %1273 = vmatprep.subr.mxu0 0.0
    %1274 = vmatpush1.msra.mxu0 0.0
    %1275 = vmatprep.subr.mxu0 0.0
    %1276 = vmatpush1.msra.mxu0 0.0
    %1277 = vmatprep.subr.mxu0 0.0
    %1278 = vmatpush1.msra.mxu0 0.0
    %1279 = vmatprep.subr.mxu0 0.0
    %1280 = vmatpush1.msra.mxu0 0.0
    %1281 = vmatprep.subr.mxu0 0.0
    %1282 = vmatpush1.msra.mxu0 0.0
    %1283 = vmatprep.subr.mxu0 0.0
    %1284 = vmatpush1.msra.mxu0 0.0
    %1285 = vmatprep.subr.mxu0 0.0
    %1286 = vmatpush1.msra.mxu0 0.0
    %1287 = vmatprep.subr.mxu0 0.0
    %1288 = vmatpush1.msra.mxu0 0.0
    %1289 = vmatprep.subr.mxu0 0.0
    %1290 = vmatpush1.msra.mxu0 0.0
    %1291 = vmatprep.subr.mxu0 0.0
    %1292 = vmatpush1.msra.mxu0 0.0
    %1293 = vmatprep.subr.mxu0 0.0
    %1294 = vmatpush1.msra.mxu0 0.0
    %1295 = vmatprep.mubr.f32.mxu0 0.0
    %1296 = vmatmul.mubr.f32.gmra.mrb[0].mxu0 %v1229
    %v1297 = vpop.f32.mrb[0].mxu0
    %v1298 = vadd.f32 0.0, %v1297
    %v1299 = vpop.f32.mrb[0].mxu0
    %1300 = vdwg.mxu0
    %v1301 = vmul.f32 %v1009, %v1298
    %v1302 = vadd.f32 %v1008, %v1301
    %v1303 = vmul.f32 %v1012, %v1298
    %1305 = vrot.lane.b32.xlu0 %v1303, 127
    %v1306 = vpop.permute.xlu0 %1305
    %v1308 = vadd.f32 %v1302, %v1306
    %v1309 = vmul.f32 %v1019, %v1298
    %1311 = vrot.lane.b32.xlu0 %v1309, 126
    %v1312 = vpop.permute.xlu0 %1311
    %v1314 = vadd.f32 %v1308, %v1312
    %v1315 = vmul.f32 %v1026, %v1298
    %v1317 = vrot.slane %v1315, 1
    %v1319 = vadd.f32 %v1314, %v1317
    %v1320 = vmul.f32 %v1032, %v1298
    %v1322 = vrot.slane %v1320, 1
    %1323 = vrot.lane.b32.xlu0 %v1322, 127
    %v1324 = vpop.permute.xlu0 %1323
    %v1326 = vadd.f32 %v1319, %v1324
    %v1327 = vmul.f32 %v1040, %v1298
    %v1329 = vrot.slane %v1327, 1
    %1330 = vrot.lane.b32.xlu0 %v1329, 126
    %v1331 = vpop.permute.xlu0 %1330
    %v1333 = vadd.f32 %v1326, %v1331
    %v1334 = vmul.f32 %v1048, %v1298
    %v1336 = vrot.slane %v1334, 2
    %v1338 = vadd.f32 %v1333, %v1336
    %v1339 = vmul.f32 %v1054, %v1298
    %v1341 = vrot.slane %v1339, 2
    %1342 = vrot.lane.b32.xlu0 %v1341, 127
    %v1343 = vpop.permute.xlu0 %1342
    %v1345 = vadd.f32 %v1338, %v1343
    %v1346 = vmul.f32 %v1062, %v1298
    %v1348 = vrot.slane %v1346, 2
    %1349 = vrot.lane.b32.xlu0 %v1348, 126
    %v1350 = vpop.permute.xlu0 %1349
    %v1352 = vadd.f32 %v1345, %v1350
    %1354 = vrot.lane.b32.xlu0 %v1352, 127
    %v1355 = vpop.permute.xlu0 %1354
    %v1357 = vmax.f32 %v1352, %v1355
    %1358 = vrot.lane.b32.xlu0 %v1352, 126
    %v1359 = vpop.permute.xlu0 %1358
    %v1361 = vmax.f32 %v1357, %v1359
    %v1362 = vmul.f32 %v1079, %v1361
    %v1363 = vmul.f32 %v1081, %v1361
    %1365 = vrot.lane.b32.xlu0 %v1363, 127
    %v1366 = vpop.permute.xlu0 %1365
    %v1368 = vadd.f32 %v1362, %v1366
    %v1369 = vmul.f32 %v1088, %v1361
    %1371 = vrot.lane.b32.xlu0 %v1369, 126
    %v1372 = vpop.permute.xlu0 %1371
    %v1374 = vadd.f32 %v1368, %v1372
    %v1375 = vadd.f32 %v1374, %v1095
    %1377 = vrot.lane.b32.xlu0 %v1375, 127
    %v1378 = vpop.permute.xlu0 %1377
    %v1380 = vmax.f32 %v1375, %v1378
    %1381 = vrot.lane.b32.xlu0 %v1375, 126
    %v1382 = vpop.permute.xlu0 %1381
    %v1384 = vmax.f32 %v1380, %v1382
    %s1385 = scalar_lea.vmem %s6, 8
    %v1386 = vld [vmem:[%s1385] sm:$0xff]
    %v1388 = vsel %vm1107, %v1384, 0
    %1390 = vmatprep.subr.mxu0 0.0
    %1391 = vmatpush1.msra.mxu0 %v1386
    %1392 = vmatprep.subr.mxu0 0.0
    %1393 = vmatpush1.msra.mxu0 0.0
    %1394 = vmatprep.subr.mxu0 0.0
    %1395 = vmatpush1.msra.mxu0 0.0
    %1396 = vmatprep.subr.mxu0 0.0
    %1397 = vmatpush1.msra.mxu0 0.0
    %1398 = vmatprep.subr.mxu0 0.0
    %1399 = vmatpush1.msra.mxu0 0.0
    %1400 = vmatprep.subr.mxu0 0.0
    %1401 = vmatpush1.msra.mxu0 0.0
    %1402 = vmatprep.subr.mxu0 0.0
    %1403 = vmatpush1.msra.mxu0 0.0
    %1404 = vmatprep.subr.mxu0 0.0
    %1405 = vmatpush1.msra.mxu0 0.0
    %1406 = vmatprep.subr.mxu0 0.0
    %1407 = vmatpush1.msra.mxu0 0.0
    %1408 = vmatprep.subr.mxu0 0.0
    %1409 = vmatpush1.msra.mxu0 0.0
    %1410 = vmatprep.subr.mxu0 0.0
    %1411 = vmatpush1.msra.mxu0 0.0
    %1412 = vmatprep.subr.mxu0 0.0
    %1413 = vmatpush1.msra.mxu0 0.0
    %1414 = vmatprep.subr.mxu0 0.0
    %1415 = vmatpush1.msra.mxu0 0.0
    %1416 = vmatprep.subr.mxu0 0.0
    %1417 = vmatpush1.msra.mxu0 0.0
    %1418 = vmatprep.subr.mxu0 0.0
    %1419 = vmatpush1.msra.mxu0 0.0
    %1420 = vmatprep.subr.mxu0 0.0
    %1421 = vmatpush1.msra.mxu0 0.0
    %1422 = vmatprep.subr.mxu0 0.0
    %1423 = vmatpush1.msra.mxu0 0.0
    %1424 = vmatprep.subr.mxu0 0.0
    %1425 = vmatpush1.msra.mxu0 0.0
    %1426 = vmatprep.subr.mxu0 0.0
    %1427 = vmatpush1.msra.mxu0 0.0
    %1428 = vmatprep.subr.mxu0 0.0
    %1429 = vmatpush1.msra.mxu0 0.0
    %1430 = vmatprep.subr.mxu0 0.0
    %1431 = vmatpush1.msra.mxu0 0.0
    %1432 = vmatprep.subr.mxu0 0.0
    %1433 = vmatpush1.msra.mxu0 0.0
    %1434 = vmatprep.subr.mxu0 0.0
    %1435 = vmatpush1.msra.mxu0 0.0
    %1436 = vmatprep.subr.mxu0 0.0
    %1437 = vmatpush1.msra.mxu0 0.0
    %1438 = vmatprep.subr.mxu0 0.0
    %1439 = vmatpush1.msra.mxu0 0.0
    %1440 = vmatprep.subr.mxu0 0.0
    %1441 = vmatpush1.msra.mxu0 0.0
    %1442 = vmatprep.subr.mxu0 0.0
    %1443 = vmatpush1.msra.mxu0 0.0
    %1444 = vmatprep.subr.mxu0 0.0
    %1445 = vmatpush1.msra.mxu0 0.0
    %1446 = vmatprep.subr.mxu0 0.0
    %1447 = vmatpush1.msra.mxu0 0.0
    %1448 = vmatprep.subr.mxu0 0.0
    %1449 = vmatpush1.msra.mxu0 0.0
    %1450 = vmatprep.subr.mxu0 0.0
    %1451 = vmatpush1.msra.mxu0 0.0
    %1452 = vmatprep.subr.mxu0 0.0
    %1453 = vmatpush1.msra.mxu0 0.0
    %1454 = vmatprep.mubr.f32.mxu0 0.0
    %1455 = vmatmul.mubr.f32.gmra.mrb[0].mxu0 %v1388
    %v1456 = vpop.f32.mrb[0].mxu0
    %v1457 = vadd.f32 0.0, %v1456
    %v1458 = vpop.f32.mrb[0].mxu0
    %1459 = vdwg.mxu0
    %v1460 = vadd.f32 %v1181, %v1457
    %v1461 = vlaneseq
    %v1462 = vshrl.u32 %v1461, 7
    %v1463 = vsub.s32 0, %v1462
    %v1464 = vrot.slane %v874, %v1463
    %v1465 = vsel %vm885, %v1464, 0.0
    %v1466 = vsel %vm886, %v1464, 0.0
    %v1467 = vsel %vm180, %v1465, 0.0
    %1468 = vadd.xlane.f32.xlu0 %v1467
    %v1469 = vpop.xlane.xlu0 %1468
    %v1470 = vsel %vm180, %v1466, 0.0
    %1471 = vadd.xlane.f32.xlu0 %v1470
    %v1472 = vpop.xlane.xlu0 %1471
    %vm1473 = vcmp.gt.f32.partialorder %v1464, %v1469
    %vm1474 = vcmp.gt.f32.partialorder %v1464, %v1472
    %vm1475 = vcmp.eq.f32.partialorder %v1464, %v1469
    %vm1476 = vcmp.eq.f32.partialorder %v1464, %v1472
    %vm1477 = vmand %vm1475, %vm899
    %vm1478 = vmand %vm1476, %vm900
    %vm1479 = vmor %vm1473, %vm1477
    %vm1480 = vmor %vm1474, %vm1478
    %v1481 = vsel %vm1479, 1, 0
    %v1482 = vsel %vm1480, 1, 0
    %v1483 = vcvt.s32.f32 %v1481
    %v1484 = vcvt.s32.f32 %v1482
    %v1485 = vsel %vm180, %v1483, 0.0
    %1486 = vadd.xlane.f32.xlu0 %v1485
    %v1487 = vpop.xlane.xlu0 %1486
    %v1488 = vsel %vm180, %v1484, 0.0
    %1489 = vadd.xlane.f32.xlu0 %v1488
    %v1490 = vpop.xlane.xlu0 %1489
    %vm1491 = vcmp.eq.f32.partialorder %v1487, %v915
    %vm1492 = vcmp.eq.f32.partialorder %v1490, %v915
    %v1493 = vsel %vm1491, 1, 0
    %v1494 = vsel %vm1492, 1, 0
    %v1495 = vcvt.s32.f32 %v1493
    %v1496 = vcvt.s32.f32 %v1494
    %v1497 = vlaneseq
    %v1498 = vshrl.u32 %v1497, 7
    %v1499 = vsub.s32 0, %v1498
    %v1500 = vrot.slane %v408, %v1499
    %v1501 = vlaneseq
    %v1502 = vshrl.u32 %v1501, 7
    %v1503 = vsub.s32 0, %v1502
    %v1504 = vrot.slane %v641, %v1503
    %v1505 = vsel %vm927, %v1504, %v1464
    %v1506 = vsel %vm922, %v1500, %v1505
    %v1508 = vsel %vm180, %v1506, 0
    %1510 = vmatprep.subr.mxu0 0.0
    %1511 = vmatpush1.msra.mxu0 %v1495
    %1512 = vmatprep.subr.mxu0 0.0
    %1513 = vmatpush1.msra.mxu0 %v1496
    %1514 = vmatprep.subr.mxu0 0.0
    %1515 = vmatpush1.msra.mxu0 0.0
    %1516 = vmatprep.subr.mxu0 0.0
    %1517 = vmatpush1.msra.mxu0 0.0
    %1518 = vmatprep.subr.mxu0 0.0
    %1519 = vmatpush1.msra.mxu0 0.0
    %1520 = vmatprep.subr.mxu0 0.0
    %1521 = vmatpush1.msra.mxu0 0.0
    %1522 = vmatprep.subr.mxu0 0.0
    %1523 = vmatpush1.msra.mxu0 0.0
    %1524 = vmatprep.subr.mxu0 0.0
    %1525 = vmatpush1.msra.mxu0 0.0
    %1526 = vmatprep.subr.mxu0 0.0
    %1527 = vmatpush1.msra.mxu0 0.0
    %1528 = vmatprep.subr.mxu0 0.0
    %1529 = vmatpush1.msra.mxu0 0.0
    %1530 = vmatprep.subr.mxu0 0.0
    %1531 = vmatpush1.msra.mxu0 0.0
    %1532 = vmatprep.subr.mxu0 0.0
    %1533 = vmatpush1.msra.mxu0 0.0
    %1534 = vmatprep.subr.mxu0 0.0
    %1535 = vmatpush1.msra.mxu0 0.0
    %1536 = vmatprep.subr.mxu0 0.0
    %1537 = vmatpush1.msra.mxu0 0.0
    %1538 = vmatprep.subr.mxu0 0.0
    %1539 = vmatpush1.msra.mxu0 0.0
    %1540 = vmatprep.subr.mxu0 0.0
    %1541 = vmatpush1.msra.mxu0 0.0
    %1542 = vmatprep.subr.mxu0 0.0
    %1543 = vmatpush1.msra.mxu0 0.0
    %1544 = vmatprep.subr.mxu0 0.0
    %1545 = vmatpush1.msra.mxu0 0.0
    %1546 = vmatprep.subr.mxu0 0.0
    %1547 = vmatpush1.msra.mxu0 0.0
    %1548 = vmatprep.subr.mxu0 0.0
    %1549 = vmatpush1.msra.mxu0 0.0
    %1550 = vmatprep.subr.mxu0 0.0
    %1551 = vmatpush1.msra.mxu0 0.0
    %1552 = vmatprep.subr.mxu0 0.0
    %1553 = vmatpush1.msra.mxu0 0.0
    %1554 = vmatprep.subr.mxu0 0.0
    %1555 = vmatpush1.msra.mxu0 0.0
    %1556 = vmatprep.subr.mxu0 0.0
    %1557 = vmatpush1.msra.mxu0 0.0
    %1558 = vmatprep.subr.mxu0 0.0
    %1559 = vmatpush1.msra.mxu0 0.0
    %1560 = vmatprep.subr.mxu0 0.0
    %1561 = vmatpush1.msra.mxu0 0.0
    %1562 = vmatprep.subr.mxu0 0.0
    %1563 = vmatpush1.msra.mxu0 0.0
    %1564 = vmatprep.subr.mxu0 0.0
    %1565 = vmatpush1.msra.mxu0 0.0
    %1566 = vmatprep.subr.mxu0 0.0
    %1567 = vmatpush1.msra.mxu0 0.0
    %1568 = vmatprep.subr.mxu0 0.0
    %1569 = vmatpush1.msra.mxu0 0.0
    %1570 = vmatprep.subr.mxu0 0.0
    %1571 = vmatpush1.msra.mxu0 0.0
    %1572 = vmatprep.subr.mxu0 0.0
    %1573 = vmatpush1.msra.mxu0 0.0
    %1574 = vmatprep.mubr.f32.mxu0 0.0
    %1575 = vmatmul.mubr.f32.gmra.mrb[0].mxu0 %v1508
    %v1576 = vpop.f32.mrb[0].mxu0
    %v1577 = vadd.f32 0.0, %v1576
    %v1578 = vpop.f32.mrb[0].mxu0
    %1579 = vdwg.mxu0
    %v1580 = vmul.f32 %v1009, %v1577
    %v1581 = vadd.f32 %v1008, %v1580
    %v1582 = vmul.f32 %v1012, %v1577
    %1584 = vrot.lane.b32.xlu0 %v1582, 127
    %v1585 = vpop.permute.xlu0 %1584
    %v1587 = vadd.f32 %v1581, %v1585
    %v1588 = vmul.f32 %v1019, %v1577
    %1590 = vrot.lane.b32.xlu0 %v1588, 126
    %v1591 = vpop.permute.xlu0 %1590
    %v1593 = vadd.f32 %v1587, %v1591
    %v1594 = vmul.f32 %v1026, %v1577
    %v1596 = vrot.slane %v1594, 1
    %v1598 = vadd.f32 %v1593, %v1596
    %v1599 = vmul.f32 %v1032, %v1577
    %v1601 = vrot.slane %v1599, 1
    %1602 = vrot.lane.b32.xlu0 %v1601, 127
    %v1603 = vpop.permute.xlu0 %1602
    %v1605 = vadd.f32 %v1598, %v1603
    %v1606 = vmul.f32 %v1040, %v1577
    %v1608 = vrot.slane %v1606, 1
    %1609 = vrot.lane.b32.xlu0 %v1608, 126
    %v1610 = vpop.permute.xlu0 %1609
    %v1612 = vadd.f32 %v1605, %v1610
    %v1613 = vmul.f32 %v1048, %v1577
    %v1615 = vrot.slane %v1613, 2
    %v1617 = vadd.f32 %v1612, %v1615
    %v1618 = vmul.f32 %v1054, %v1577
    %v1620 = vrot.slane %v1618, 2
    %1621 = vrot.lane.b32.xlu0 %v1620, 127
    %v1622 = vpop.permute.xlu0 %1621
    %v1624 = vadd.f32 %v1617, %v1622
    %v1625 = vmul.f32 %v1062, %v1577
    %v1627 = vrot.slane %v1625, 2
    %1628 = vrot.lane.b32.xlu0 %v1627, 126
    %v1629 = vpop.permute.xlu0 %1628
    %v1631 = vadd.f32 %v1624, %v1629
    %1633 = vrot.lane.b32.xlu0 %v1631, 127
    %v1634 = vpop.permute.xlu0 %1633
    %v1636 = vmax.f32 %v1631, %v1634
    %1637 = vrot.lane.b32.xlu0 %v1631, 126
    %v1638 = vpop.permute.xlu0 %1637
    %v1640 = vmax.f32 %v1636, %v1638
    %v1641 = vmul.f32 %v1079, %v1640
    %v1642 = vmul.f32 %v1081, %v1640
    %1644 = vrot.lane.b32.xlu0 %v1642, 127
    %v1645 = vpop.permute.xlu0 %1644
    %v1647 = vadd.f32 %v1641, %v1645
    %v1648 = vmul.f32 %v1088, %v1640
    %1650 = vrot.lane.b32.xlu0 %v1648, 126
    %v1651 = vpop.permute.xlu0 %1650
    %v1653 = vadd.f32 %v1647, %v1651
    %v1654 = vadd.f32 %v1653, %v1095
    %1656 = vrot.lane.b32.xlu0 %v1654, 127
    %v1657 = vpop.permute.xlu0 %1656
    %v1659 = vmax.f32 %v1654, %v1657
    %1660 = vrot.lane.b32.xlu0 %v1654, 126
    %v1661 = vpop.permute.xlu0 %1660
    %v1663 = vmax.f32 %v1659, %v1661
    %s1664 = scalar_lea.vmem %s6, 16
    %v1665 = vld [vmem:[%s1664] sm:$0xff]
    %v1667 = vsel %vm1107, %v1663, 0
    %1669 = vmatprep.subr.mxu0 0.0
    %1670 = vmatpush1.msra.mxu0 %v1665
    %1671 = vmatprep.subr.mxu0 0.0
    %1672 = vmatpush1.msra.mxu0 0.0
    %1673 = vmatprep.subr.mxu0 0.0
    %1674 = vmatpush1.msra.mxu0 0.0
    %1675 = vmatprep.subr.mxu0 0.0
    %1676 = vmatpush1.msra.mxu0 0.0
    %1677 = vmatprep.subr.mxu0 0.0
    %1678 = vmatpush1.msra.mxu0 0.0
    %1679 = vmatprep.subr.mxu0 0.0
    %1680 = vmatpush1.msra.mxu0 0.0
    %1681 = vmatprep.subr.mxu0 0.0
    %1682 = vmatpush1.msra.mxu0 0.0
    %1683 = vmatprep.subr.mxu0 0.0
    %1684 = vmatpush1.msra.mxu0 0.0
    %1685 = vmatprep.subr.mxu0 0.0
    %1686 = vmatpush1.msra.mxu0 0.0
    %1687 = vmatprep.subr.mxu0 0.0
    %1688 = vmatpush1.msra.mxu0 0.0
    %1689 = vmatprep.subr.mxu0 0.0
    %1690 = vmatpush1.msra.mxu0 0.0
    %1691 = vmatprep.subr.mxu0 0.0
    %1692 = vmatpush1.msra.mxu0 0.0
    %1693 = vmatprep.subr.mxu0 0.0
    %1694 = vmatpush1.msra.mxu0 0.0
    %1695 = vmatprep.subr.mxu0 0.0
    %1696 = vmatpush1.msra.mxu0 0.0
    %1697 = vmatprep.subr.mxu0 0.0
    %1698 = vmatpush1.msra.mxu0 0.0
    %1699 = vmatprep.subr.mxu0 0.0
    %1700 = vmatpush1.msra.mxu0 0.0
    %1701 = vmatprep.subr.mxu0 0.0
    %1702 = vmatpush1.msra.mxu0 0.0
    %1703 = vmatprep.subr.mxu0 0.0
    %1704 = vmatpush1.msra.mxu0 0.0
    %1705 = vmatprep.subr.mxu0 0.0
    %1706 = vmatpush1.msra.mxu0 0.0
    %1707 = vmatprep.subr.mxu0 0.0
    %1708 = vmatpush1.msra.mxu0 0.0
    %1709 = vmatprep.subr.mxu0 0.0
    %1710 = vmatpush1.msra.mxu0 0.0
    %1711 = vmatprep.subr.mxu0 0.0
    %1712 = vmatpush1.msra.mxu0 0.0
    %1713 = vmatprep.subr.mxu0 0.0
    %1714 = vmatpush1.msra.mxu0 0.0
    %1715 = vmatprep.subr.mxu0 0.0
    %1716 = vmatpush1.msra.mxu0 0.0
    %1717 = vmatprep.subr.mxu0 0.0
    %1718 = vmatpush1.msra.mxu0 0.0
    %1719 = vmatprep.subr.mxu0 0.0
    %1720 = vmatpush1.msra.mxu0 0.0
    %1721 = vmatprep.subr.mxu0 0.0
    %1722 = vmatpush1.msra.mxu0 0.0
    %1723 = vmatprep.subr.mxu0 0.0
    %1724 = vmatpush1.msra.mxu0 0.0
    %1725 = vmatprep.subr.mxu0 0.0
    %1726 = vmatpush1.msra.mxu0 0.0
    %1727 = vmatprep.subr.mxu0 0.0
    %1728 = vmatpush1.msra.mxu0 0.0
    %1729 = vmatprep.subr.mxu0 0.0
    %1730 = vmatpush1.msra.mxu0 0.0
    %1731 = vmatprep.subr.mxu0 0.0
    %1732 = vmatpush1.msra.mxu0 0.0
    %1733 = vmatprep.mubr.f32.mxu0 0.0
    %1734 = vmatmul.mubr.f32.gmra.mrb[0].mxu0 %v1667
    %v1735 = vpop.f32.mrb[0].mxu0
    %v1736 = vadd.f32 0.0, %v1735
    %v1737 = vpop.f32.mrb[0].mxu0
    %1738 = vdwg.mxu0
    %v1739 = vadd.f32 %v1460, %v1736
    %vm1740 = vcmp.gt.f32.partialorder %v1739, 0.0
    %v1741 = vmin.f32 %v1739, 0.0
    %v1742 = vmul.f32 %v1741, 1.442695
    %v1743 = vpow.pop %v1742
    %v1744 = vsub.f32 %v1743, 1.0
    %v1745 = vsel %vm1740, %v1739, %v1744
    %v1746 = vld [vmem:[%s8] sm:$0xff]
    %v1747 = vld [vmem:[%s8 + $0x8] sm:$0xff]
    %v1748 = vld [vmem:[%s8 + $0x10] sm:$0xff]
    %v1749 = vld [vmem:[%s8 + $0x18] sm:$0xff]
    %v1750 = vld [vmem:[%s9] sm:$0x1]
    %vm1751 = vcmask 261120
    %v1753 = vsel %vm1751, %v1745, 0
    %1755 = vmatprep.subr.mxu0 0.0
    %1756 = vmatpush1.msra.mxu0 %v1746
    %1757 = vmatprep.subr.mxu0 0.0
    %1758 = vmatpush1.msra.mxu0 %v1747
    %1759 = vmatprep.subr.mxu0 0.0
    %1760 = vmatpush1.msra.mxu0 %v1748
    %1761 = vmatprep.subr.mxu0 0.0
    %1762 = vmatpush1.msra.mxu0 %v1749
    %1763 = vmatprep.subr.mxu0 0.0
    %1764 = vmatpush1.msra.mxu0 0.0
    %1765 = vmatprep.subr.mxu0 0.0
    %1766 = vmatpush1.msra.mxu0 0.0
    %1767 = vmatprep.subr.mxu0 0.0
    %1768 = vmatpush1.msra.mxu0 0.0
    %1769 = vmatprep.subr.mxu0 0.0
    %1770 = vmatpush1.msra.mxu0 0.0
    %1771 = vmatprep.subr.mxu0 0.0
    %1772 = vmatpush1.msra.mxu0 0.0
    %1773 = vmatprep.subr.mxu0 0.0
    %1774 = vmatpush1.msra.mxu0 0.0
    %1775 = vmatprep.subr.mxu0 0.0
    %1776 = vmatpush1.msra.mxu0 0.0
    %1777 = vmatprep.subr.mxu0 0.0
    %1778 = vmatpush1.msra.mxu0 0.0
    %1779 = vmatprep.subr.mxu0 0.0
    %1780 = vmatpush1.msra.mxu0 0.0
    %1781 = vmatprep.subr.mxu0 0.0
    %1782 = vmatpush1.msra.mxu0 0.0
    %1783 = vmatprep.subr.mxu0 0.0
    %1784 = vmatpush1.msra.mxu0 0.0
    %1785 = vmatprep.subr.mxu0 0.0
    %1786 = vmatpush1.msra.mxu0 0.0
    %1787 = vmatprep.subr.mxu0 0.0
    %1788 = vmatpush1.msra.mxu0 0.0
    %1789 = vmatprep.subr.mxu0 0.0
    %1790 = vmatpush1.msra.mxu0 0.0
    %1791 = vmatprep.subr.mxu0 0.0
    %1792 = vmatpush1.msra.mxu0 0.0
    %1793 = vmatprep.subr.mxu0 0.0
    %1794 = vmatpush1.msra.mxu0 0.0
    %1795 = vmatprep.subr.mxu0 0.0
    %1796 = vmatpush1.msra.mxu0 0.0
    %1797 = vmatprep.subr.mxu0 0.0
    %1798 = vmatpush1.msra.mxu0 0.0
    %1799 = vmatprep.subr.mxu0 0.0
    %1800 = vmatpush1.msra.mxu0 0.0
    %1801 = vmatprep.subr.mxu0 0.0
    %1802 = vmatpush1.msra.mxu0 0.0
    %1803 = vmatprep.subr.mxu0 0.0
    %1804 = vmatpush1.msra.mxu0 0.0
    %1805 = vmatprep.subr.mxu0 0.0
    %1806 = vmatpush1.msra.mxu0 0.0
    %1807 = vmatprep.subr.mxu0 0.0
    %1808 = vmatpush1.msra.mxu0 0.0
    %1809 = vmatprep.subr.mxu0 0.0
    %1810 = vmatpush1.msra.mxu0 0.0
    %1811 = vmatprep.subr.mxu0 0.0
    %1812 = vmatpush1.msra.mxu0 0.0
    %1813 = vmatprep.subr.mxu0 0.0
    %1814 = vmatpush1.msra.mxu0 0.0
    %1815 = vmatprep.subr.mxu0 0.0
    %1816 = vmatpush1.msra.mxu0 0.0
    %1817 = vmatprep.subr.mxu0 0.0
    %1818 = vmatpush1.msra.mxu0 0.0
    %1819 = vmatprep.mubr.f32.mxu0 0.0
    %1820 = vmatmul.mubr.f32.gmra.mrb[0].mxu0 %v1753
    %v1821 = vpop.f32.mrb[0].mxu0
    %v1822 = vadd.f32 %v1750, %v1821
    %v1823 = vpop.f32.mrb[0].mxu0
    %1824 = vdwg.mxu0
    %vm1825 = vcmp.gt.f32.partialorder %v1822, 0.0
    %v1826 = vmin.f32 %v1822, 0.0
    %v1827 = vmul.f32 %v1826, 1.442695
    %v1828 = vpow.pop %v1827
    %v1829 = vsub.f32 %v1828, 1.0
    %v1830 = vsel %vm1825, %v1822, %v1829
    %v1831 = vld [vmem:[%s10] sm:$0x3f]
    %v1832 = vld [vmem:[%s11] sm:$0x1]
    %vm1833 = vcmask 48128
    %v1835 = vsel %vm1833, %v1830, 0
    %vm1837 = vcmask 1045504
    %v1839 = vsel %vm1837, %v1831, 0
    %1841 = vmatprep.subr.mxu0 0.0
    %1842 = vmatpush1.msra.mxu0 %v1839
    %1843 = vmatprep.subr.mxu0 0.0
    %1844 = vmatpush1.msra.mxu0 0.0
    %1845 = vmatprep.subr.mxu0 0.0
    %1846 = vmatpush1.msra.mxu0 0.0
    %1847 = vmatprep.subr.mxu0 0.0
    %1848 = vmatpush1.msra.mxu0 0.0
    %1849 = vmatprep.subr.mxu0 0.0
    %1850 = vmatpush1.msra.mxu0 0.0
    %1851 = vmatprep.subr.mxu0 0.0
    %1852 = vmatpush1.msra.mxu0 0.0
    %1853 = vmatprep.subr.mxu0 0.0
    %1854 = vmatpush1.msra.mxu0 0.0
    %1855 = vmatprep.subr.mxu0 0.0
    %1856 = vmatpush1.msra.mxu0 0.0
    %1857 = vmatprep.subr.mxu0 0.0
    %1858 = vmatpush1.msra.mxu0 0.0
    %1859 = vmatprep.subr.mxu0 0.0
    %1860 = vmatpush1.msra.mxu0 0.0
    %1861 = vmatprep.subr.mxu0 0.0
    %1862 = vmatpush1.msra.mxu0 0.0
    %1863 = vmatprep.subr.mxu0 0.0
    %1864 = vmatpush1.msra.mxu0 0.0
    %1865 = vmatprep.subr.mxu0 0.0
    %1866 = vmatpush1.msra.mxu0 0.0
    %1867 = vmatprep.subr.mxu0 0.0
    %1868 = vmatpush1.msra.mxu0 0.0
    %1869 = vmatprep.subr.mxu0 0.0
    %1870 = vmatpush1.msra.mxu0 0.0
    %1871 = vmatprep.subr.mxu0 0.0
    %1872 = vmatpush1.msra.mxu0 0.0
    %1873 = vmatprep.subr.mxu0 0.0
    %1874 = vmatpush1.msra.mxu0 0.0
    %1875 = vmatprep.subr.mxu0 0.0
    %1876 = vmatpush1.msra.mxu0 0.0
    %1877 = vmatprep.subr.mxu0 0.0
    %1878 = vmatpush1.msra.mxu0 0.0
    %1879 = vmatprep.subr.mxu0 0.0
    %1880 = vmatpush1.msra.mxu0 0.0
    %1881 = vmatprep.subr.mxu0 0.0
    %1882 = vmatpush1.msra.mxu0 0.0
    %1883 = vmatprep.subr.mxu0 0.0
    %1884 = vmatpush1.msra.mxu0 0.0
    %1885 = vmatprep.subr.mxu0 0.0
    %1886 = vmatpush1.msra.mxu0 0.0
    %1887 = vmatprep.subr.mxu0 0.0
    %1888 = vmatpush1.msra.mxu0 0.0
    %1889 = vmatprep.subr.mxu0 0.0
    %1890 = vmatpush1.msra.mxu0 0.0
    %1891 = vmatprep.subr.mxu0 0.0
    %1892 = vmatpush1.msra.mxu0 0.0
    %1893 = vmatprep.subr.mxu0 0.0
    %1894 = vmatpush1.msra.mxu0 0.0
    %1895 = vmatprep.subr.mxu0 0.0
    %1896 = vmatpush1.msra.mxu0 0.0
    %1897 = vmatprep.subr.mxu0 0.0
    %1898 = vmatpush1.msra.mxu0 0.0
    %1899 = vmatprep.subr.mxu0 0.0
    %1900 = vmatpush1.msra.mxu0 0.0
    %1901 = vmatprep.subr.mxu0 0.0
    %1902 = vmatpush1.msra.mxu0 0.0
    %1903 = vmatprep.subr.mxu0 0.0
    %1904 = vmatpush1.msra.mxu0 0.0
    %1905 = vmatprep.mubr.f32.mxu0 0.0
    %1906 = vmatmul.mubr.f32.gmra.mrb[0].mxu0 %v1835
    %v1907 = vpop.f32.mrb[0].mxu0
    %v1908 = vadd.f32 %v1832, %v1907
    %v1909 = vpop.f32.mrb[0].mxu0
    %1910 = vdwg.mxu0
    %vm1911 = vcmask 8192
    %1912 = vst.msk [vmem:[#allocation7] sm:$0x1] %vm1911, %v1908
    // Predicated region
    $region58: #{dgcnn_forward.1} parent=1 // pred_check
      _
    $region59: #{dgcnn_forward.1} parent=1 // pred_check_branch
      %1914 = sbr.rel (0) target = $region61
    $region60: #{dgcnn_forward.1} parent=1 // pred_region
      %s1916 = ssub.s32 16, 16
      %1917 = vsyncadd [#allocation3], %s1916
      %s1919 = sshll.u32 [#allocation7], 4
      %s1920 = int_to_ptr.vmem [resolvable:$true] %s1919
      %1922 = dma.vmem_to_hbm [thread:$0]  %s1920, 16, %s12, [#allocation3]
    $region61: #{dgcnn_forward.1} parent=1 // pred_fallthru
      _
    // Predicated region
    $region62: #{dgcnn_forward.1} parent=1 // pred_check
      _
    $region63: #{dgcnn_forward.1} parent=1 // pred_check_branch
      %1924 = sbr.rel (0) target = $region65
    $region64: #{dgcnn_forward.1} parent=1 // pred_region
      %1925 = dma.done [#allocation3], 16
    $region65: #{dgcnn_forward.1} parent=1 // pred_fallthru
      _
    %1926 = vsyncpa [#allocation3], 1
    %1927 = vsyncpa [#allocation4], 1
    %1928 = vsyncpa [#allocation6], 1

</llo_original>
